<compile_context>
chip_gen: v7x
topology: tpu7x:2x2x1
jax: 0.10.0
libtpu: 0.0.40
codegen_flags: <defaults>
</compile_context>

<pallas_src>
import jax
import jax.numpy as jnp
import numpy as np
from jax.experimental import pallas as pl
from jax.experimental.pallas import tpu as pltpu


def _fused_backbone_kernel(x_ref, w1_ref, b1_ref, w2_ref, b2_ref, w3_ref, b3_ref,
                           o_ref, pad1_ref, pad_ref):
    """One batch element per grid step; all intermediates stay in VMEM.

    x_ref  : (1, H, W)               raw input image (f32)
    w1_ref : (3, W+2, W*C1)          layer-1 banded weights (f32), b1_ref: (1, W*C1)
    w2_ref : (3, (W+2)*C1, W*C2)     layer-2 banded weights (bf16), b2_ref: (1, W*C2)
    w3_ref : (3, (W+2)*C2, Wo*C3)    layer-3 banded weights (bf16), b3_ref: (1, Wo*C3)
    o_ref  : (1, Ho, Wo*C3)          lane-dense output block
    pad1_ref: VMEM (H+2, W+2)        padded input scratch (f32)
    pad_ref : VMEM (H+2, (W+2)*C1)   padded hidden-activation scratch (f32)
    """
    f32 = jnp.float32
    bf16 = jnp.bfloat16
    H, W = x_ref.shape[1], x_ref.shape[2]
    Wp = W + 2
    Ho = (H - 1) // 2 + 1
    C = pad_ref.shape[1] // Wp                      # hidden width (C1 == C2)

    def band_matmul(lhs_rows, w_ref):
        """sum_kh lhs_rows[kh] @ w_ref[kh], accumulated in f32 on the MXU."""
        acc = jnp.dot(lhs_rows[0], w_ref[0], preferred_element_type=f32)
        for kh in (1, 2):
            acc = acc + jnp.dot(lhs_rows[kh], w_ref[kh], preferred_element_type=f32)
        return acc

    # Fresh zero borders every image (cheap: a handful of full-vreg stores). Scratch
    # persists across grid steps and the batch axis may be split across cores, so we
    # deliberately do NOT gate this on program_id == 0.
    pad1_ref[...] = jnp.zeros_like(pad1_ref)
    pad_ref[...] = jnp.zeros_like(pad_ref)

    # ---- layer 1: conv3x3(1 -> C1, stride 1, pad 1) + ReLU (in-kernel, no wrapper glue)
    pad1_ref[1:H + 1, 1:W + 1] = x_ref[0]
    rows1 = tuple(pad1_ref[kh:kh + H, :] for kh in range(3))          # (H, W+2) f32
    h1 = jnp.maximum(band_matmul(rows1, w1_ref) + b1_ref[...], 0.0)   # (H, W*C1) f32

    # ---- layer 2: conv3x3(C1 -> C2, stride 1, pad 1) + ReLU ----
    pad_ref[1:H + 1, C:C + W * C] = h1
    rows2 = tuple(pad_ref[kh:kh + H, :].astype(bf16) for kh in range(3))
    h2 = jnp.maximum(band_matmul(rows2, w2_ref) + b2_ref[...], 0.0)   # (H, W*C2) f32

    # ---- layer 3: conv3x3(C2 -> C3, stride 2, pad 1) + ReLU ----
    pad_ref[1:H + 1, C:C + W * C] = h2
    # Tap kh of the stride-2 conv reads padded rows kh, kh+2, ..., kh+2*(Ho-1):
    # build even/odd row views with plain single-row reads + axis-0 concat.
    even = jnp.concatenate([pad_ref[r:r + 1, :] for r in range(0, 2 * Ho + 1, 2)],
                           axis=0)                                    # (Ho+1, (W+2)*C2)
    odd = jnp.concatenate([pad_ref[r:r + 1, :] for r in range(1, 2 * Ho, 2)],
                          axis=0)                                     # (Ho,   (W+2)*C2)
    rows3 = (even[0:Ho].astype(bf16), odd.astype(bf16), even[1:Ho + 1].astype(bf16))
    h3 = jnp.maximum(band_matmul(rows3, w3_ref) + b3_ref[...], 0.0)   # (Ho, Wo*C3) f32

    o_ref[0] = h3


def _prep_weights(params, H, W):
    """One-time prep: OIHW conv weights -> 3 banded row-major matrices per layer.

    band[kh][(s*j + kw)*Cin + ci, j*Cout + co] = w[co, ci, kh, kw]   (s = stride),
    so one matmul of a zero-padded row-major activation slab against band[kh]
    computes that kernel-row's contribution for a whole output row block.
    """
    del H
    mats = []
    for (w, b, stride) in params:
        w_np = np.asarray(w, np.float32)                      # (Cout, Cin, 3, 3)
        cout, cin = w_np.shape[0], w_np.shape[1]
        wout = (W - 1) // stride + 1
        band = np.zeros((3, (W + 2) * cin, wout * cout), np.float32)
        for kh in range(3):
            for kw in range(3):
                tap = w_np[:, :, kh, kw].T                    # (Cin, Cout)
                for j in range(wout):
                    q = stride * j + kw
                    band[kh, q * cin:(q + 1) * cin, j * cout:(j + 1) * cout] = tap
        brow = np.tile(np.asarray(b, np.float32), wout).reshape(1, wout * cout)
        wdtype = jnp.float32 if cin == 1 else jnp.bfloat16    # bf16 MXU operands
        mats.append((jnp.asarray(band, dtype=wdtype), jnp.asarray(brow)))
    return tuple(mats)


def backbone_forward(x_nchw, mats):
    """Pallas implementation of BackboneCnn.forward (NCHW in, NCHW out)."""
    (w1, b1), (w2, b2), (w3, b3) = mats
    N, cin, H, W = x_nchw.shape
    assert cin == 1, "BackboneCnn expects a single input channel"
    C1 = b1.shape[1] // W
    C2 = b2.shape[1] // W
    Ho, Wo = (H - 1) // 2 + 1, (W - 1) // 2 + 1
    C3 = b3.shape[1] // Wo
    assert C1 == C2, "shared padded-activation scratch assumes equal hidden widths"

    x = x_nchw.reshape(N, H, W)                               # metadata-only squeeze

    out = pl.pallas_call(
        _fused_backbone_kernel,
        out_shape=jax.ShapeDtypeStruct((N, Ho, Wo * C3), jnp.float32),
        grid=(N,),
        in_specs=[
            pl.BlockSpec((1, H, W), lambda n: (n, 0, 0)),
            pl.BlockSpec(w1.shape, lambda n: (0, 0, 0)),
            pl.BlockSpec(b1.shape, lambda n: (0, 0)),
            pl.BlockSpec(w2.shape, lambda n: (0, 0, 0)),
            pl.BlockSpec(b2.shape, lambda n: (0, 0)),
            pl.BlockSpec(w3.shape, lambda n: (0, 0, 0)),
            pl.BlockSpec(b3.shape, lambda n: (0, 0)),
        ],
        out_specs=pl.BlockSpec((1, Ho, Wo * C3), lambda n: (n, 0, 0)),
        scratch_shapes=[
            pltpu.VMEM((H + 2, W + 2), jnp.float32),          # padded input image
            pltpu.VMEM((H + 2, (W + 2) * C1), jnp.float32),   # padded hidden activation
        ],
        compiler_params=pltpu.CompilerParams(
            dimension_semantics=("parallel",)),
    )(x, w1, b1, w2, b2, w3, b3)

    # (N, Ho, Wo*C3) -> (N, Ho, Wo, C3) -> NCHW: the only wrapper-side compute op.
    return jnp.transpose(out.reshape(N, Ho, Wo, C3), (0, 3, 1, 2))


def ref_forward(x_nchw, params):
    """Plain-JAX reference (matches PyTorch conv semantics)."""
    y = x_nchw
    for (w, b, stride) in params:
        y = jax.lax.conv_general_dilated(
            y, w, window_strides=(stride, stride), padding=((1, 1), (1, 1)),
            dimension_numbers=("NCHW", "OIHW", "NCHW"),
            precision=jax.lax.Precision.HIGHEST)
        y = y + b[None, :, None, None]
        y = jnp.maximum(y, 0.0)
    return y


def init_params(key):
    """Deterministic init mimicking nn.Conv2d default (uniform +-1/sqrt(fan_in))."""
    specs = [(16, 1, 1), (16, 16, 1), (32, 16, 2)]            # (Cout, Cin, stride)
    params = []
    for (cout, cin, stride) in specs:
        key, kw, kb = jax.random.split(key, 3)
        bound = 1.0 / float(np.sqrt(cin * 3 * 3))
        w = jax.random.uniform(kw, (cout, cin, 3, 3), jnp.float32, -bound, bound)
        b = jax.random.uniform(kb, (cout,), jnp.float32, -bound, bound)
        params.append((w, b, stride))
    return params


if __name__ == "__main__":
    key = jax.random.PRNGKey(0)
    kx, kp = jax.random.split(key)

    # BackboneCnn expects a single input channel: NCHW = (2, 1, 16, 16)
    x = jax.random.normal(kx, (2, 1, 16, 16), jnp.float32)
    params = init_params(kp)
    mats = _prep_weights(params, 16, 16)      # one-time weight prep (hoisted)

    fwd = jax.jit(backbone_forward)
    out = jax.block_until_ready(fwd(x, mats))
    assert out.shape == (2, 32, 8, 8), out.shape

    ref = ref_forward(x, params)
    np.testing.assert_allclose(np.asarray(out), np.asarray(ref), rtol=5e-2, atol=5e-2)

    print("KERNEL_OK")
</pallas_src>

<mosaic_0001>
module attributes {stable_mosaic.version = 11 : i64} {
  func.func @_fused_backbone_kernel(%arg0: i32, %arg1: memref<1x16x16xf32, #tpu.memory_space<vmem>>, %arg2: memref<3x18x256xf32, #tpu.memory_space<vmem>>, %arg3: memref<1x256xf32, #tpu.memory_space<vmem>>, %arg4: memref<3x288x256xbf16, #tpu.memory_space<vmem>>, %arg5: memref<1x256xf32, #tpu.memory_space<vmem>>, %arg6: memref<3x288x256xbf16, #tpu.memory_space<vmem>>, %arg7: memref<1x256xf32, #tpu.memory_space<vmem>>, %arg8: memref<1x8x256xf32, #tpu.memory_space<vmem>>, %arg9: memref<18x18xf32, #tpu.memory_space<vmem>>, %arg10: memref<18x288xf32, #tpu.memory_space<vmem>>) attributes {dimension_semantics = [#tpu.dimension_semantics<parallel>], iteration_bounds = array<i64: 2>, scalar_prefetch = 0 : i64, scratch_operands = 2 : i64, tpu.core_type = #tpu.core_type<tc>, window_params = [{transform_indices = @transform_0, window_bounds = array<i64: 1, 16, 16>}, {pipeline_mode = #tpu.pipeline_mode<synchronous>, transform_indices = @transform_1, window_bounds = array<i64: 3, 18, 256>}, {pipeline_mode = #tpu.pipeline_mode<synchronous>, transform_indices = @transform_2, window_bounds = array<i64: 1, 256>}, {pipeline_mode = #tpu.pipeline_mode<synchronous>, transform_indices = @transform_3, window_bounds = array<i64: 3, 288, 256>}, {pipeline_mode = #tpu.pipeline_mode<synchronous>, transform_indices = @transform_4, window_bounds = array<i64: 1, 256>}, {pipeline_mode = #tpu.pipeline_mode<synchronous>, transform_indices = @transform_5, window_bounds = array<i64: 3, 288, 256>}, {pipeline_mode = #tpu.pipeline_mode<synchronous>, transform_indices = @transform_6, window_bounds = array<i64: 1, 256>}, {transform_indices = @transform_7, window_bounds = array<i64: 1, 8, 256>}]} {
    %cst = arith.constant 0.000000e+00 : f32
    %0 = vector.broadcast %cst : f32 to vector<18x18xf32>
    %c0 = arith.constant 0 : index
    %c0_0 = arith.constant 0 : index
    %1 = vector.load %arg9[%c0, %c0_0] : memref<18x18xf32, #tpu.memory_space<vmem>>, vector<18x18xf32>
    tpu.vector_store %arg9[%c0, %c0_0], %0 {strides = array<i32>} : memref<18x18xf32, #tpu.memory_space<vmem>>, vector<18x18xf32>,
    %cst_1 = arith.constant 0.000000e+00 : f32
    %2 = vector.broadcast %cst_1 : f32 to vector<18x288xf32>
    %c0_2 = arith.constant 0 : index
    %c0_3 = arith.constant 0 : index
    %3 = vector.load %arg10[%c0_2, %c0_3] : memref<18x288xf32, #tpu.memory_space<vmem>>, vector<18x288xf32>
    tpu.vector_store %arg10[%c0_2, %c0_3], %2 {strides = array<i32>} : memref<18x288xf32, #tpu.memory_space<vmem>>, vector<18x288xf32>,
    %c0_4 = arith.constant 0 : index
    %c0_5 = arith.constant 0 : index
    %c0_6 = arith.constant 0 : index
    %4 = vector.load %arg1[%c0_4, %c0_5, %c0_6] : memref<1x16x16xf32, #tpu.memory_space<vmem>>, vector<1x16x16xf32>
    %5 = vector.shape_cast %4 : vector<1x16x16xf32> to vector<16x16xf32>
    %c1 = arith.constant 1 : index
    %c1_7 = arith.constant 1 : index
    %6 = vector.load %arg9[%c1, %c1_7] : memref<18x18xf32, #tpu.memory_space<vmem>>, vector<16x16xf32>
    tpu.vector_store %arg9[%c1, %c1_7], %5 {strides = array<i32>} : memref<18x18xf32, #tpu.memory_space<vmem>>, vector<16x16xf32>,
    %c0_8 = arith.constant 0 : index
    %c0_9 = arith.constant 0 : index
    %7 = vector.load %arg9[%c0_8, %c0_9] : memref<18x18xf32, #tpu.memory_space<vmem>>, vector<16x18xf32>
    %c1_10 = arith.constant 1 : index
    %c0_11 = arith.constant 0 : index
    %8 = vector.load %arg9[%c1_10, %c0_11] : memref<18x18xf32, #tpu.memory_space<vmem>>, vector<16x18xf32>
    %c2 = arith.constant 2 : index
    %c0_12 = arith.constant 0 : index
    %9 = vector.load %arg9[%c2, %c0_12] : memref<18x18xf32, #tpu.memory_space<vmem>>, vector<16x18xf32>
    %c0_13 = arith.constant 0 : index
    %c0_14 = arith.constant 0 : index
    %c0_15 = arith.constant 0 : index
    %10 = vector.load %arg2[%c0_13, %c0_14, %c0_15] : memref<3x18x256xf32, #tpu.memory_space<vmem>>, vector<1x18x256xf32>
    %11 = vector.shape_cast %10 : vector<1x18x256xf32> to vector<18x256xf32>
    %cst_16 = arith.constant dense<0.000000e+00> : vector<16x256xf32>
    %12 = tpu.matmul %7, %11, %cst_16 {dimension_numbers = #tpu.dot_dimension_numbers<[1], [0], [0], [1], [0, 0, 1, 1], [], []>} : vector<16x18xf32>, vector<18x256xf32>, vector<16x256xf32> -> vector<16x256xf32>
    %c1_17 = arith.constant 1 : index
    %c0_18 = arith.constant 0 : index
    %c0_19 = arith.constant 0 : index
    %13 = vector.load %arg2[%c1_17, %c0_18, %c0_19] : memref<3x18x256xf32, #tpu.memory_space<vmem>>, vector<1x18x256xf32>
    %14 = vector.shape_cast %13 : vector<1x18x256xf32> to vector<18x256xf32>
    %cst_20 = arith.constant dense<0.000000e+00> : vector<16x256xf32>
    %15 = tpu.matmul %8, %14, %cst_20 {dimension_numbers = #tpu.dot_dimension_numbers<[1], [0], [0], [1], [0, 0, 1, 1], [], []>} : vector<16x18xf32>, vector<18x256xf32>, vector<16x256xf32> -> vector<16x256xf32>
    %16 = arith.addf %12, %15 : vector<16x256xf32>
    %c2_21 = arith.constant 2 : index
    %c0_22 = arith.constant 0 : index
    %c0_23 = arith.constant 0 : index
    %17 = vector.load %arg2[%c2_21, %c0_22, %c0_23] : memref<3x18x256xf32, #tpu.memory_space<vmem>>, vector<1x18x256xf32>
    %18 = vector.shape_cast %17 : vector<1x18x256xf32> to vector<18x256xf32>
    %cst_24 = arith.constant dense<0.000000e+00> : vector<16x256xf32>
    %19 = tpu.matmul %9, %18, %cst_24 {dimension_numbers = #tpu.dot_dimension_numbers<[1], [0], [0], [1], [0, 0, 1, 1], [], []>} : vector<16x18xf32>, vector<18x256xf32>, vector<16x256xf32> -> vector<16x256xf32>
    %20 = arith.addf %16, %19 : vector<16x256xf32>
    %c0_25 = arith.constant 0 : index
    %c0_26 = arith.constant 0 : index
    %21 = vector.load %arg3[%c0_25, %c0_26] : memref<1x256xf32, #tpu.memory_space<vmem>>, vector<1x256xf32>
    %22 = vector.broadcast %21 : vector<1x256xf32> to vector<16x256xf32>
    %23 = arith.addf %20, %22 : vector<16x256xf32>
    %cst_27 = arith.constant 0.000000e+00 : f32
    %24 = vector.broadcast %cst_27 : f32 to vector<16x256xf32>
    %25 = arith.maximumf %23, %24 : vector<16x256xf32>
    %c1_28 = arith.constant 1 : index
    %c16 = arith.constant 16 : index
    %26 = vector.load %arg10[%c1_28, %c16] : memref<18x288xf32, #tpu.memory_space<vmem>>, vector<16x256xf32>
    tpu.vector_store %arg10[%c1_28, %c16], %25 {strides = array<i32>} : memref<18x288xf32, #tpu.memory_space<vmem>>, vector<16x256xf32>,
    %c0_29 = arith.constant 0 : index
    %c0_30 = arith.constant 0 : index
    %27 = vector.load %arg10[%c0_29, %c0_30] : memref<18x288xf32, #tpu.memory_space<vmem>>, vector<16x288xf32>
    %28 = arith.truncf %27 : vector<16x288xf32> to vector<16x288xbf16>
    %c1_31 = arith.constant 1 : index
    %c0_32 = arith.constant 0 : index
    %29 = vector.load %arg10[%c1_31, %c0_32] : memref<18x288xf32, #tpu.memory_space<vmem>>, vector<16x288xf32>
    %30 = arith.truncf %29 : vector<16x288xf32> to vector<16x288xbf16>
    %c2_33 = arith.constant 2 : index
    %c0_34 = arith.constant 0 : index
    %31 = vector.load %arg10[%c2_33, %c0_34] : memref<18x288xf32, #tpu.memory_space<vmem>>, vector<16x288xf32>
    %32 = arith.truncf %31 : vector<16x288xf32> to vector<16x288xbf16>
    %c0_35 = arith.constant 0 : index
    %c0_36 = arith.constant 0 : index
    %c0_37 = arith.constant 0 : index
    %33 = vector.load %arg4[%c0_35, %c0_36, %c0_37] : memref<3x288x256xbf16, #tpu.memory_space<vmem>>, vector<1x288x256xbf16>
    %34 = vector.shape_cast %33 : vector<1x288x256xbf16> to vector<288x256xbf16>
    %cst_38 = arith.constant dense<0.000000e+00> : vector<16x256xf32>
    %35 = tpu.matmul %28, %34, %cst_38 {dimension_numbers = #tpu.dot_dimension_numbers<[1], [0], [0], [1], [0, 0, 1, 1], [], []>} : vector<16x288xbf16>, vector<288x256xbf16>, vector<16x256xf32> -> vector<16x256xf32>
    %c1_39 = arith.constant 1 : index
    %c0_40 = arith.constant 0 : index
    %c0_41 = arith.constant 0 : index
    %36 = vector.load %arg4[%c1_39, %c0_40, %c0_41] : memref<3x288x256xbf16, #tpu.memory_space<vmem>>, vector<1x288x256xbf16>
    %37 = vector.shape_cast %36 : vector<1x288x256xbf16> to vector<288x256xbf16>
    %cst_42 = arith.constant dense<0.000000e+00> : vector<16x256xf32>
    %38 = tpu.matmul %30, %37, %cst_42 {dimension_numbers = #tpu.dot_dimension_numbers<[1], [0], [0], [1], [0, 0, 1, 1], [], []>} : vector<16x288xbf16>, vector<288x256xbf16>, vector<16x256xf32> -> vector<16x256xf32>
    %39 = arith.addf %35, %38 : vector<16x256xf32>
    %c2_43 = arith.constant 2 : index
    %c0_44 = arith.constant 0 : index
    %c0_45 = arith.constant 0 : index
    %40 = vector.load %arg4[%c2_43, %c0_44, %c0_45] : memref<3x288x256xbf16, #tpu.memory_space<vmem>>, vector<1x288x256xbf16>
    %41 = vector.shape_cast %40 : vector<1x288x256xbf16> to vector<288x256xbf16>
    %cst_46 = arith.constant dense<0.000000e+00> : vector<16x256xf32>
    %42 = tpu.matmul %32, %41, %cst_46 {dimension_numbers = #tpu.dot_dimension_numbers<[1], [0], [0], [1], [0, 0, 1, 1], [], []>} : vector<16x288xbf16>, vector<288x256xbf16>, vector<16x256xf32> -> vector<16x256xf32>
    %43 = arith.addf %39, %42 : vector<16x256xf32>
    %c0_47 = arith.constant 0 : index
    %c0_48 = arith.constant 0 : index
    %44 = vector.load %arg5[%c0_47, %c0_48] : memref<1x256xf32, #tpu.memory_space<vmem>>, vector<1x256xf32>
    %45 = vector.broadcast %44 : vector<1x256xf32> to vector<16x256xf32>
    %46 = arith.addf %43, %45 : vector<16x256xf32>
    %cst_49 = arith.constant 0.000000e+00 : f32
    %47 = vector.broadcast %cst_49 : f32 to vector<16x256xf32>
    %48 = arith.maximumf %46, %47 : vector<16x256xf32>
    %c1_50 = arith.constant 1 : index
    %c16_51 = arith.constant 16 : index
    %49 = vector.load %arg10[%c1_50, %c16_51] : memref<18x288xf32, #tpu.memory_space<vmem>>, vector<16x256xf32>
    tpu.vector_store %arg10[%c1_50, %c16_51], %48 {strides = array<i32>} : memref<18x288xf32, #tpu.memory_space<vmem>>, vector<16x256xf32>,
    %c0_52 = arith.constant 0 : index
    %c0_53 = arith.constant 0 : index
    %50 = vector.load %arg10[%c0_52, %c0_53] : memref<18x288xf32, #tpu.memory_space<vmem>>, vector<1x288xf32>
    %c2_54 = arith.constant 2 : index
    %c0_55 = arith.constant 0 : index
    %51 = vector.load %arg10[%c2_54, %c0_55] : memref<18x288xf32, #tpu.memory_space<vmem>>, vector<1x288xf32>
    %c4 = arith.constant 4 : index
    %c0_56 = arith.constant 0 : index
    %52 = vector.load %arg10[%c4, %c0_56] : memref<18x288xf32, #tpu.memory_space<vmem>>, vector<1x288xf32>
    %c6 = arith.constant 6 : index
    %c0_57 = arith.constant 0 : index
    %53 = vector.load %arg10[%c6, %c0_57] : memref<18x288xf32, #tpu.memory_space<vmem>>, vector<1x288xf32>
    %c8 = arith.constant 8 : index
    %c0_58 = arith.constant 0 : index
    %54 = vector.load %arg10[%c8, %c0_58] : memref<18x288xf32, #tpu.memory_space<vmem>>, vector<1x288xf32>
    %c10 = arith.constant 10 : index
    %c0_59 = arith.constant 0 : index
    %55 = vector.load %arg10[%c10, %c0_59] : memref<18x288xf32, #tpu.memory_space<vmem>>, vector<1x288xf32>
    %c12 = arith.constant 12 : index
    %c0_60 = arith.constant 0 : index
    %56 = vector.load %arg10[%c12, %c0_60] : memref<18x288xf32, #tpu.memory_space<vmem>>, vector<1x288xf32>
    %c14 = arith.constant 14 : index
    %c0_61 = arith.constant 0 : index
    %57 = vector.load %arg10[%c14, %c0_61] : memref<18x288xf32, #tpu.memory_space<vmem>>, vector<1x288xf32>
    %c16_62 = arith.constant 16 : index
    %c0_63 = arith.constant 0 : index
    %58 = vector.load %arg10[%c16_62, %c0_63] : memref<18x288xf32, #tpu.memory_space<vmem>>, vector<1x288xf32>
    %59 = tpu.concatenate %50, %51, %52, %53, %54, %55, %56, %57, %58 in 0 : vector<1x288xf32>, vector<1x288xf32>, vector<1x288xf32>, vector<1x288xf32>, vector<1x288xf32>, vector<1x288xf32>, vector<1x288xf32>, vector<1x288xf32>, vector<1x288xf32> -> vector<9x288xf32>
    %c1_64 = arith.constant 1 : index
    %c0_65 = arith.constant 0 : index
    %60 = vector.load %arg10[%c1_64, %c0_65] : memref<18x288xf32, #tpu.memory_space<vmem>>, vector<1x288xf32>
    %c3 = arith.constant 3 : index
    %c0_66 = arith.constant 0 : index
    %61 = vector.load %arg10[%c3, %c0_66] : memref<18x288xf32, #tpu.memory_space<vmem>>, vector<1x288xf32>
    %c5 = arith.constant 5 : index
    %c0_67 = arith.constant 0 : index
    %62 = vector.load %arg10[%c5, %c0_67] : memref<18x288xf32, #tpu.memory_space<vmem>>, vector<1x288xf32>
    %c7 = arith.constant 7 : index
    %c0_68 = arith.constant 0 : index
    %63 = vector.load %arg10[%c7, %c0_68] : memref<18x288xf32, #tpu.memory_space<vmem>>, vector<1x288xf32>
    %c9 = arith.constant 9 : index
    %c0_69 = arith.constant 0 : index
    %64 = vector.load %arg10[%c9, %c0_69] : memref<18x288xf32, #tpu.memory_space<vmem>>, vector<1x288xf32>
    %c11 = arith.constant 11 : index
    %c0_70 = arith.constant 0 : index
    %65 = vector.load %arg10[%c11, %c0_70] : memref<18x288xf32, #tpu.memory_space<vmem>>, vector<1x288xf32>
    %c13 = arith.constant 13 : index
    %c0_71 = arith.constant 0 : index
    %66 = vector.load %arg10[%c13, %c0_71] : memref<18x288xf32, #tpu.memory_space<vmem>>, vector<1x288xf32>
    %c15 = arith.constant 15 : index
    %c0_72 = arith.constant 0 : index
    %67 = vector.load %arg10[%c15, %c0_72] : memref<18x288xf32, #tpu.memory_space<vmem>>, vector<1x288xf32>
    %68 = tpu.concatenate %60, %61, %62, %63, %64, %65, %66, %67 in 0 : vector<1x288xf32>, vector<1x288xf32>, vector<1x288xf32>, vector<1x288xf32>, vector<1x288xf32>, vector<1x288xf32>, vector<1x288xf32>, vector<1x288xf32> -> vector<8x288xf32>
    %69 = vector.extract_strided_slice %59 {offsets = [0, 0], sizes = [8, 288], strides = [1, 1]} : vector<9x288xf32> to vector<8x288xf32>
    %70 = arith.truncf %69 : vector<8x288xf32> to vector<8x288xbf16>
    %71 = arith.truncf %68 : vector<8x288xf32> to vector<8x288xbf16>
    %72 = vector.extract_strided_slice %59 {offsets = [1, 0], sizes = [8, 288], strides = [1, 1]} : vector<9x288xf32> to vector<8x288xf32>
    %73 = arith.truncf %72 : vector<8x288xf32> to vector<8x288xbf16>
    %c0_73 = arith.constant 0 : index
    %c0_74 = arith.constant 0 : index
    %c0_75 = arith.constant 0 : index
    %74 = vector.load %arg6[%c0_73, %c0_74, %c0_75] : memref<3x288x256xbf16, #tpu.memory_space<vmem>>, vector<1x288x256xbf16>
    %75 = vector.shape_cast %74 : vector<1x288x256xbf16> to vector<288x256xbf16>
    %cst_76 = arith.constant dense<0.000000e+00> : vector<8x256xf32>
    %76 = tpu.matmul %70, %75, %cst_76 {dimension_numbers = #tpu.dot_dimension_numbers<[1], [0], [0], [1], [0, 0, 1, 1], [], []>} : vector<8x288xbf16>, vector<288x256xbf16>, vector<8x256xf32> -> vector<8x256xf32>
    %c1_77 = arith.constant 1 : index
    %c0_78 = arith.constant 0 : index
    %c0_79 = arith.constant 0 : index
    %77 = vector.load %arg6[%c1_77, %c0_78, %c0_79] : memref<3x288x256xbf16, #tpu.memory_space<vmem>>, vector<1x288x256xbf16>
    %78 = vector.shape_cast %77 : vector<1x288x256xbf16> to vector<288x256xbf16>
    %cst_80 = arith.constant dense<0.000000e+00> : vector<8x256xf32>
    %79 = tpu.matmul %71, %78, %cst_80 {dimension_numbers = #tpu.dot_dimension_numbers<[1], [0], [0], [1], [0, 0, 1, 1], [], []>} : vector<8x288xbf16>, vector<288x256xbf16>, vector<8x256xf32> -> vector<8x256xf32>
    %80 = arith.addf %76, %79 : vector<8x256xf32>
    %c2_81 = arith.constant 2 : index
    %c0_82 = arith.constant 0 : index
    %c0_83 = arith.constant 0 : index
    %81 = vector.load %arg6[%c2_81, %c0_82, %c0_83] : memref<3x288x256xbf16, #tpu.memory_space<vmem>>, vector<1x288x256xbf16>
    %82 = vector.shape_cast %81 : vector<1x288x256xbf16> to vector<288x256xbf16>
    %cst_84 = arith.constant dense<0.000000e+00> : vector<8x256xf32>
    %83 = tpu.matmul %73, %82, %cst_84 {dimension_numbers = #tpu.dot_dimension_numbers<[1], [0], [0], [1], [0, 0, 1, 1], [], []>} : vector<8x288xbf16>, vector<288x256xbf16>, vector<8x256xf32> -> vector<8x256xf32>
    %84 = arith.addf %80, %83 : vector<8x256xf32>
    %c0_85 = arith.constant 0 : index
    %c0_86 = arith.constant 0 : index
    %85 = vector.load %arg7[%c0_85, %c0_86] : memref<1x256xf32, #tpu.memory_space<vmem>>, vector<1x256xf32>
    %86 = vector.broadcast %85 : vector<1x256xf32> to vector<8x256xf32>
    %87 = arith.addf %84, %86 : vector<8x256xf32>
    %cst_87 = arith.constant 0.000000e+00 : f32
    %88 = vector.broadcast %cst_87 : f32 to vector<8x256xf32>
    %89 = arith.maximumf %87, %88 : vector<8x256xf32>
    %c0_88 = arith.constant 0 : index
    %c0_89 = arith.constant 0 : index
    %c0_90 = arith.constant 0 : index
    %90 = vector.load %arg8[%c0_88, %c0_89, %c0_90] : memref<1x8x256xf32, #tpu.memory_space<vmem>>, vector<1x8x256xf32>
    %91 = vector.shape_cast %90 : vector<1x8x256xf32> to vector<8x256xf32>
    %92 = vector.shape_cast %89 : vector<8x256xf32> to vector<1x8x256xf32>
    tpu.vector_store %arg8[%c0_88, %c0_89, %c0_90], %92 {strides = array<i32>} : memref<1x8x256xf32, #tpu.memory_space<vmem>>, vector<1x8x256xf32>,
    return
  }
  func.func @transform_0(%arg0: i32) -> (i32, i32, i32) {
    %c0_i32 = arith.constant 0 : i32
    %c0_i32_0 = arith.constant 0 : i32
    %c0_i32_1 = arith.constant 0 : i32
    return %arg0, %c0_i32, %c0_i32_0 : i32, i32, i32
  }
  func.func @transform_1(%arg0: i32) -> (i32, i32, i32) {
    %c0_i32 = arith.constant 0 : i32
    %c0_i32_0 = arith.constant 0 : i32
    %c0_i32_1 = arith.constant 0 : i32
    %c0_i32_2 = arith.constant 0 : i32
    return %c0_i32, %c0_i32_0, %c0_i32_1 : i32, i32, i32
  }
  func.func @transform_2(%arg0: i32) -> (i32, i32) {
    %c0_i32 = arith.constant 0 : i32
    %c0_i32_0 = arith.constant 0 : i32
    %c0_i32_1 = arith.constant 0 : i32
    return %c0_i32, %c0_i32_0 : i32, i32
  }
  func.func @transform_3(%arg0: i32) -> (i32, i32, i32) {
    %c0_i32 = arith.constant 0 : i32
    %c0_i32_0 = arith.constant 0 : i32
    %c0_i32_1 = arith.constant 0 : i32
    %c0_i32_2 = arith.constant 0 : i32
    return %c0_i32, %c0_i32_0, %c0_i32_1 : i32, i32, i32
  }
  func.func @transform_4(%arg0: i32) -> (i32, i32) {
    %c0_i32 = arith.constant 0 : i32
    %c0_i32_0 = arith.constant 0 : i32
    %c0_i32_1 = arith.constant 0 : i32
    return %c0_i32, %c0_i32_0 : i32, i32
  }
  func.func @transform_5(%arg0: i32) -> (i32, i32, i32) {
    %c0_i32 = arith.constant 0 : i32
    %c0_i32_0 = arith.constant 0 : i32
    %c0_i32_1 = arith.constant 0 : i32
    %c0_i32_2 = arith.constant 0 : i32
    return %c0_i32, %c0_i32_0, %c0_i32_1 : i32, i32, i32
  }
  func.func @transform_6(%arg0: i32) -> (i32, i32) {
    %c0_i32 = arith.constant 0 : i32
    %c0_i32_0 = arith.constant 0 : i32
    %c0_i32_1 = arith.constant 0 : i32
    return %c0_i32, %c0_i32_0 : i32, i32
  }
  func.func @transform_7(%arg0: i32) -> (i32, i32, i32) {
    %c0_i32 = arith.constant 0 : i32
    %c0_i32_0 = arith.constant 0 : i32
    %c0_i32_1 = arith.constant 0 : i32
    return %arg0, %c0_i32, %c0_i32_0 : i32, i32, i32
  }
}

</mosaic_0001>

<llo_original>
// kernel: backbone_forward.1
$region0: #{backbone_forward.1}
  #allocation0 [shape = 'u32[]', space=smem, size = 0x4, offset = 0x4, fixed_abs, tag = 'smem constant byte address 0x4 - core index']
  #allocation1 [shape = 'u32[144,128]{1,0:T(1,128)}', space=vmem, size = 0x12000, scoped, tag = 'internal scratch']
  #allocation2 [shape = 'f32[18,18]{1,0:T(8,128)}', space=vmem, size = 0x3000, scoped, tag = 'scratch operand']
  #allocation3 [shape = 'f32[18,288]{1,0:T(8,128)}', space=vmem, size = 0x9000, scoped, tag = 'scratch operand']
  %s0 = inlined_call_operand.hbm [shape: f32[2,16,16], index: 0, kind: input, shape index: {}]
  %s1 = inlined_call_operand.hbm [shape: f32[3,18,256], index: 1, kind: input, shape index: {}]
  %s2 = inlined_call_operand.vmem [shape: f32[1,256], index: 2, kind: input, shape index: {}]
  %s3 = inlined_call_operand.hbm [shape: bf16[3,288,256], index: 3, kind: input, shape index: {}]
  %s4 = inlined_call_operand.vmem [shape: f32[1,256], index: 4, kind: input, shape index: {}]
  %s5 = inlined_call_operand.hbm [shape: bf16[3,288,256], index: 5, kind: input, shape index: {}]
  %s6 = inlined_call_operand.vmem [shape: f32[1,256], index: 6, kind: input, shape index: {}]
  %s7 = inlined_call_operand.vmem [shape: f32[2,8,256], index: 7, kind: output, shape index: {}]
  %s8 = sld [smem:[#allocation0]]
  $region77: #{backbone_forward.1} parent=0
    _
  %s10 = ssub.s32 1, %s8
  %s11 = scalar_select 0, %s10, %s8
  $region1: #{backbone_forward.1} parent=0
    #allocation4 [shape = 'u8[16384]{0}', space=vmem, size = 0x4000, scoped, tag = 'input window, operand 0']
    #allocation5 [shape = 's32[2]{0}', space=sflag, size = 0x8, scoped, tag = 'scoped memory for backbone_forward.1']
    #allocation6 [shape = 'u8[73728]{0}', space=vmem, size = 0x12000, scoped, tag = 'input window, operand 1, single buffered']
    #allocation7 [shape = 's32[1]{0}', space=sflag, size = 0x4, scoped, tag = 'scoped memory for backbone_forward.1']
    #allocation8 [shape = 'u8[442368]{0}', space=vmem, size = 0x6c000, scoped, tag = 'input window, operand 3, single buffered']
    #allocation9 [shape = 'u8[442368]{0}', space=vmem, size = 0x6c000, scoped, tag = 'input window, operand 5, single buffered']
    #allocation10 [shape = 's32[1]{0}', space=sflag, size = 0x4, scoped, tag = 'scoped memory for backbone_forward.1']
    %12 = vsyncpa [#allocation5], 0
    %s13 = scalar_lea.sflag [#allocation5], 1
    %14 = vsyncpa %s13, 0
    %15 = vsyncpa [#allocation7], 0
    %16 = vsyncpa [#allocation10], 0
    loop: start=0, step=1, limit=4
    $region2: #{backbone_forward.1} parent=1 // loop_pre_header
      _
    $region3: #{backbone_forward.1} parent=1 // loop_header
      %s18 = sphi 0, %s22
      %p19 = scmp.ge.s32.totalorder %s18, 4
      %s28 = sphi 0, %s30
      %s31 = sphi 0, %s28
      %s32 = sphi 0, %s31
      %s48 = sphi 0, %s32
      %s52 = sphi 0, %s52
      %s54 = sphi 0, %s52
      %s55 = sphi 0, %s54
      %s69 = sphi 0, %s55
      %s73 = sphi 0, %s73
      %s75 = sphi 0, %s73
      %s76 = sphi 0, %s75
      %s90 = sphi 0, %s76
      %s94 = sphi 0, %s94
      %s96 = sphi 0, %s94
      %s97 = sphi 0, %s96
      %s111 = sphi 0, %s97
      %s115 = sphi 0, %s115
      %s117 = sphi 0, %s115
      %s118 = sphi 0, %s117
      %s132 = sphi 0, %s118
      %s136 = sphi 0, %s136
      %s138 = sphi 0, %s136
      %s139 = sphi 0, %s138
      %s153 = sphi 0, %s139
      %s157 = sphi 0, %s157
      %s159 = sphi 0, %s157
      %s160 = sphi 0, %s159
      %s174 = sphi 0, %s160
      %s180 = sphi 0, %s182
      %s183 = sphi 0, %s180
      %s184 = sphi 0, %s183
      %s200 = sphi 0, %s184
    $region4: #{backbone_forward.1} parent=1 // loop_header_branch
      %21 = sbr.rel (%p19) target = $region8
    $region5: #{backbone_forward.1} parent=1 // loop_body
      %s23 = ssub.s32 %s18, 1
      %s24 = ssub.s32 %s18, 2
      %s25 = sadd.s32 %s18, 1
      %s26 = ssub.s32 %s18, %s25
      %p27 = scmp.eq.s32.totalorder %s26, 0
      %s29 = sadd.s32 %s28, 1
      %s30 = scalar_select %p27, %s28, %s29
      %p33 = pneg %p27
      %p34 = scmp.eq.s32.totalorder %s18, 1
      %p35 = por %p33, %p34
      %p36 = scmp.ne.s32.totalorder %s28, %s31
      %p37 = scmp.eq.s32.totalorder %s18, 0
      %p38 = por %p36, %p37
      %p39 = scmp.ne.s32.totalorder %s28, %s31
      %p40 = scmp.eq.s32.totalorder %s23, 1
      %p41 = por %p39, %p40
      %p42 = scmp.ne.s32.totalorder %s31, %s32
      %p43 = scmp.eq.s32.totalorder %s23, 0
      %p44 = por %p42, %p43
      %p45 = scmp.ne.s32.totalorder %s31, %s32
      %p46 = scmp.eq.s32.totalorder %s24, 1
      %p47 = por %p45, %p46
      %p49 = scmp.ne.s32.totalorder %s32, %s48
      %p50 = scmp.eq.s32.totalorder %s24, 0
      %p51 = por %p49, %p50
      %s53 = sadd.s32 %s52, 1
      %p56 = scmp.eq.s32.totalorder %s18, 1
      %p57 = scmp.ne.s32.totalorder %s52, %s54
      %p58 = scmp.eq.s32.totalorder %s18, 0
      %p59 = por %p57, %p58
      %p60 = scmp.ne.s32.totalorder %s52, %s54
      %p61 = scmp.eq.s32.totalorder %s23, 1
      %p62 = por %p60, %p61
      %p63 = scmp.ne.s32.totalorder %s54, %s55
      %p64 = scmp.eq.s32.totalorder %s23, 0
      %p65 = por %p63, %p64
      %p66 = scmp.ne.s32.totalorder %s54, %s55
      %p67 = scmp.eq.s32.totalorder %s24, 1
      %p68 = por %p66, %p67
      %p70 = scmp.ne.s32.totalorder %s55, %s69
      %p71 = scmp.eq.s32.totalorder %s24, 0
      %p72 = por %p70, %p71
      %s74 = sadd.s32 %s73, 1
      %p77 = scmp.eq.s32.totalorder %s18, 1
      %p78 = scmp.ne.s32.totalorder %s73, %s75
      %p79 = scmp.eq.s32.totalorder %s18, 0
      %p80 = por %p78, %p79
      %p81 = scmp.ne.s32.totalorder %s73, %s75
      %p82 = scmp.eq.s32.totalorder %s23, 1
      %p83 = por %p81, %p82
      %p84 = scmp.ne.s32.totalorder %s75, %s76
      %p85 = scmp.eq.s32.totalorder %s23, 0
      %p86 = por %p84, %p85
      %p87 = scmp.ne.s32.totalorder %s75, %s76
      %p88 = scmp.eq.s32.totalorder %s24, 1
      %p89 = por %p87, %p88
      %p91 = scmp.ne.s32.totalorder %s76, %s90
      %p92 = scmp.eq.s32.totalorder %s24, 0
      %p93 = por %p91, %p92
      %s95 = sadd.s32 %s94, 1
      %p98 = scmp.eq.s32.totalorder %s18, 1
      %p99 = scmp.ne.s32.totalorder %s94, %s96
      %p100 = scmp.eq.s32.totalorder %s18, 0
      %p101 = por %p99, %p100
      %p102 = scmp.ne.s32.totalorder %s94, %s96
      %p103 = scmp.eq.s32.totalorder %s23, 1
      %p104 = por %p102, %p103
      %p105 = scmp.ne.s32.totalorder %s96, %s97
      %p106 = scmp.eq.s32.totalorder %s23, 0
      %p107 = por %p105, %p106
      %p108 = scmp.ne.s32.totalorder %s96, %s97
      %p109 = scmp.eq.s32.totalorder %s24, 1
      %p110 = por %p108, %p109
      %p112 = scmp.ne.s32.totalorder %s97, %s111
      %p113 = scmp.eq.s32.totalorder %s24, 0
      %p114 = por %p112, %p113
      %s116 = sadd.s32 %s115, 1
      %p119 = scmp.eq.s32.totalorder %s18, 1
      %p120 = scmp.ne.s32.totalorder %s115, %s117
      %p121 = scmp.eq.s32.totalorder %s18, 0
      %p122 = por %p120, %p121
      %p123 = scmp.ne.s32.totalorder %s115, %s117
      %p124 = scmp.eq.s32.totalorder %s23, 1
      %p125 = por %p123, %p124
      %p126 = scmp.ne.s32.totalorder %s117, %s118
      %p127 = scmp.eq.s32.totalorder %s23, 0
      %p128 = por %p126, %p127
      %p129 = scmp.ne.s32.totalorder %s117, %s118
      %p130 = scmp.eq.s32.totalorder %s24, 1
      %p131 = por %p129, %p130
      %p133 = scmp.ne.s32.totalorder %s118, %s132
      %p134 = scmp.eq.s32.totalorder %s24, 0
      %p135 = por %p133, %p134
      %s137 = sadd.s32 %s136, 1
      %p140 = scmp.eq.s32.totalorder %s18, 1
      %p141 = scmp.ne.s32.totalorder %s136, %s138
      %p142 = scmp.eq.s32.totalorder %s18, 0
      %p143 = por %p141, %p142
      %p144 = scmp.ne.s32.totalorder %s136, %s138
      %p145 = scmp.eq.s32.totalorder %s23, 1
      %p146 = por %p144, %p145
      %p147 = scmp.ne.s32.totalorder %s138, %s139
      %p148 = scmp.eq.s32.totalorder %s23, 0
      %p149 = por %p147, %p148
      %p150 = scmp.ne.s32.totalorder %s138, %s139
      %p151 = scmp.eq.s32.totalorder %s24, 1
      %p152 = por %p150, %p151
      %p154 = scmp.ne.s32.totalorder %s139, %s153
      %p155 = scmp.eq.s32.totalorder %s24, 0
      %p156 = por %p154, %p155
      %s158 = sadd.s32 %s157, 1
      %p161 = scmp.eq.s32.totalorder %s18, 1
      %p162 = scmp.ne.s32.totalorder %s157, %s159
      %p163 = scmp.eq.s32.totalorder %s18, 0
      %p164 = por %p162, %p163
      %p165 = scmp.ne.s32.totalorder %s157, %s159
      %p166 = scmp.eq.s32.totalorder %s23, 1
      %p167 = por %p165, %p166
      %p168 = scmp.ne.s32.totalorder %s159, %s160
      %p169 = scmp.eq.s32.totalorder %s23, 0
      %p170 = por %p168, %p169
      %p171 = scmp.ne.s32.totalorder %s159, %s160
      %p172 = scmp.eq.s32.totalorder %s24, 1
      %p173 = por %p171, %p172
      %p175 = scmp.ne.s32.totalorder %s160, %s174
      %p176 = scmp.eq.s32.totalorder %s24, 0
      %p177 = por %p175, %p176
      %s178 = ssub.s32 %s18, %s25
      %p179 = scmp.eq.s32.totalorder %s178, 0
      %s181 = sadd.s32 %s180, 1
      %s182 = scalar_select %p179, %s180, %s181
      %p185 = pneg %p179
      %p186 = scmp.eq.s32.totalorder %s18, 1
      %p187 = por %p185, %p186
      %p188 = scmp.ne.s32.totalorder %s180, %s183
      %p189 = scmp.eq.s32.totalorder %s18, 0
      %p190 = por %p188, %p189
      %p191 = scmp.ne.s32.totalorder %s180, %s183
      %p192 = scmp.eq.s32.totalorder %s23, 1
      %p193 = por %p191, %p192
      %p194 = scmp.ne.s32.totalorder %s183, %s184
      %p195 = scmp.eq.s32.totalorder %s23, 0
      %p196 = por %p194, %p195
      %p197 = scmp.ne.s32.totalorder %s183, %s184
      %p198 = scmp.eq.s32.totalorder %s24, 1
      %p199 = por %p197, %p198
      %p201 = scmp.ne.s32.totalorder %s184, %s200
      %p202 = scmp.eq.s32.totalorder %s24, 0
      %p203 = por %p201, %p202
      %p204 = scmp.le.s32.totalorder 1, %s18
      %p205 = scmp.lt.s32.totalorder %s18, 3
      %p206 = pnand %p204, %p205
      %p207 = pneg %p206
      // Predicated region
      $region9: #{backbone_forward.1} parent=5 // pred_check
        _
      $region10: #{backbone_forward.1} parent=5 // pred_check_branch
        %209 = sbr.rel (%p206) target = $region12
      $region11: #{backbone_forward.1} parent=5 // pred_region
        %s210 = ssub.s32 %s18, 1
        // Predicated region
        $region13: #{backbone_forward.1} parent=11 // pred_check
          %p211 = pneg %p65
        $region14: #{backbone_forward.1} parent=11 // pred_check_branch
          %213 = sbr.rel (%p211) target = $region16
        $region15: #{backbone_forward.1} parent=11 // pred_region
          %s215 = ssub.s32 2304, 2304
          %216 = vsyncadd [#allocation7], %s215
          %s217 = sshll.u32 [#allocation6], 4
          %s218 = int_to_ptr.vmem [resolvable:$true] %s217
          %223 = dma.hbm_to_vmem [thread:$0]  %s1, 2304, %s218, [#allocation7], 256, 256, 16
        $region16: #{backbone_forward.1} parent=11 // pred_fallthru
          _
        // Predicated region
        $region17: #{backbone_forward.1} parent=11 // pred_check
          %p224 = pneg %p86
        $region18: #{backbone_forward.1} parent=11 // pred_check_branch
          %226 = sbr.rel (%p224) target = $region20
        $region19: #{backbone_forward.1} parent=11 // pred_region
          _
        $region20: #{backbone_forward.1} parent=11 // pred_fallthru
          _
        // Predicated region
        $region21: #{backbone_forward.1} parent=11 // pred_check
          %p227 = pneg %p107
        $region22: #{backbone_forward.1} parent=11 // pred_check_branch
          %229 = sbr.rel (%p227) target = $region24
        $region23: #{backbone_forward.1} parent=11 // pred_region
          %s231 = ssub.s32 13824, 13824
          %232 = vsyncadd [#allocation7], %s231
          %s233 = sshll.u32 [#allocation8], 4
          %s234 = int_to_ptr.vmem [resolvable:$true] %s233
          %239 = dma.hbm_to_vmem [thread:$0]  %s3, 13824, %s234, [#allocation7], 128, 128, 8
        $region24: #{backbone_forward.1} parent=11 // pred_fallthru
          _
        // Predicated region
        $region25: #{backbone_forward.1} parent=11 // pred_check
          %p240 = pneg %p128
        $region26: #{backbone_forward.1} parent=11 // pred_check_branch
          %242 = sbr.rel (%p240) target = $region28
        $region27: #{backbone_forward.1} parent=11 // pred_region
          _
        $region28: #{backbone_forward.1} parent=11 // pred_fallthru
          _
        // Predicated region
        $region29: #{backbone_forward.1} parent=11 // pred_check
          %p243 = pneg %p149
        $region30: #{backbone_forward.1} parent=11 // pred_check_branch
          %245 = sbr.rel (%p243) target = $region32
        $region31: #{backbone_forward.1} parent=11 // pred_region
          %s247 = ssub.s32 13824, 13824
          %248 = vsyncadd [#allocation10], %s247
          %s249 = sshll.u32 [#allocation9], 4
          %s250 = int_to_ptr.vmem [resolvable:$true] %s249
          %255 = dma.hbm_to_vmem [thread:$0]  %s5, 13824, %s250, [#allocation10], 128, 128, 8
        $region32: #{backbone_forward.1} parent=11 // pred_fallthru
          _
        // Predicated region
        $region33: #{backbone_forward.1} parent=11 // pred_check
          %p256 = pneg %p170
        $region34: #{backbone_forward.1} parent=11 // pred_check_branch
          %258 = sbr.rel (%p256) target = $region36
        $region35: #{backbone_forward.1} parent=11 // pred_region
          _
        $region36: #{backbone_forward.1} parent=11 // pred_fallthru
          _
      $region12: #{backbone_forward.1} parent=5 // pred_fallthru
        _
      %p259 = scmp.lt.s32.totalorder %s18, 2
      // Predicated region
      $region37: #{backbone_forward.1} parent=5 // pred_check
        %p260 = pneg %p259
      $region38: #{backbone_forward.1} parent=5 // pred_check_branch
        %262 = sbr.rel (%p260) target = $region40
      $region39: #{backbone_forward.1} parent=5 // pred_region
        // Predicated region
        $region41: #{backbone_forward.1} parent=39 // pred_check
          %p263 = pneg %p38
        $region42: #{backbone_forward.1} parent=39 // pred_check_branch
          %265 = sbr.rel (%p263) target = $region44
        $region43: #{backbone_forward.1} parent=39 // pred_region
          %s266 = sand.u32 %s28, 1
          %s267 = scalar_lea.sflag [#allocation5], %s266
          %s268 = sand.u32 %s28, 1
          %s269 = smul.addr %s268, 16
          %s270 = scalar_lea.vmem [#allocation4], %s269
          %s272 = ssub.s32 256, 256
          %273 = vsyncadd %s267, %s272
          %s274 = smul.addr %s18, 2
          %s275 = smul.addr %s274, 128
          %s276 = scalar_lea.hbm %s0, %s275
          %s277 = sshll.u32 %s270, 4
          %s278 = int_to_ptr.vmem [resolvable:$true] %s277
          %283 = dma.hbm_to_vmem [thread:$0]  %s276, 256, %s278, %s267, 128, 128, 8
        $region44: #{backbone_forward.1} parent=39 // pred_fallthru
          _
      $region40: #{backbone_forward.1} parent=5 // pred_fallthru
        _
      %p284 = scmp.le.s32.totalorder 1, %s18
      %p285 = scmp.lt.s32.totalorder %s18, 3
      %p286 = pnand %p284, %p285
      %p287 = pneg %p286
      // Predicated region
      $region45: #{backbone_forward.1} parent=5 // pred_check
        _
      $region46: #{backbone_forward.1} parent=5 // pred_check_branch
        %289 = sbr.rel (%p286) target = $region48
      $region47: #{backbone_forward.1} parent=5 // pred_region
        %s290 = ssub.s32 %s18, 1
        %s291 = sand.u32 %s31, 1
        %s292 = scalar_lea.sflag [#allocation5], %s291
        %s293 = sand.u32 %s31, 1
        %s294 = smul.addr %s293, 16
        %s295 = scalar_lea.vmem [#allocation4], %s294
        // Predicated region
        $region49: #{backbone_forward.1} parent=47 // pred_check
          %p296 = pneg %p44
        $region50: #{backbone_forward.1} parent=47 // pred_check_branch
          %298 = sbr.rel (%p296) target = $region52
        $region51: #{backbone_forward.1} parent=47 // pred_region
          %299 = dma.done %s292, 256
        $region52: #{backbone_forward.1} parent=47 // pred_fallthru
          _
        // Predicated region
        $region53: #{backbone_forward.1} parent=47 // pred_check
          %p300 = pneg %p65
        $region54: #{backbone_forward.1} parent=47 // pred_check_branch
          %302 = sbr.rel (%p300) target = $region56
        $region55: #{backbone_forward.1} parent=47 // pred_region
          %303 = dma.done [#allocation7], 2304
        $region56: #{backbone_forward.1} parent=47 // pred_fallthru
          _
        // Predicated region
        $region57: #{backbone_forward.1} parent=47 // pred_check
          %p304 = pneg %p107
        $region58: #{backbone_forward.1} parent=47 // pred_check_branch
          %306 = sbr.rel (%p304) target = $region60
        $region59: #{backbone_forward.1} parent=47 // pred_region
          %307 = dma.done [#allocation7], 13824
        $region60: #{backbone_forward.1} parent=47 // pred_fallthru
          _
        // Predicated region
        $region61: #{backbone_forward.1} parent=47 // pred_check
          %p308 = pneg %p149
        $region62: #{backbone_forward.1} parent=47 // pred_check_branch
          %310 = sbr.rel (%p308) target = $region64
        $region63: #{backbone_forward.1} parent=47 // pred_region
          %311 = dma.done [#allocation10], 13824
        $region64: #{backbone_forward.1} parent=47 // pred_fallthru
          _
        %s312 = sand.u32 %s31, 1
        %s313 = scalar_lea.sflag [#allocation5], %s312
        %s314 = sand.u32 %s31, 1
        %s315 = smul.addr %s314, 16
        %s316 = scalar_lea.vmem [#allocation4], %s315
        %p317 = pneg %p44
        %p318 = pneg %p41
        %p319 = pneg %p65
        %p320 = pneg %p62
        %p321 = pneg %p86
        %p322 = pneg %p83
        %p323 = pneg %p107
        %p324 = pneg %p104
        %p325 = pneg %p128
        %p326 = pneg %p125
        %p327 = pneg %p149
        %p328 = pneg %p146
        %p329 = pneg %p170
        %p330 = pneg %p167
        %p331 = pneg %p196
        %p332 = pneg %p193
        %p333 = scmp.lt.s32.totalorder %s23, 1
        %s334 = scalar_select %p333, %s23, 1
        %s335 = smul.addr %s334, 2
        %s336 = smul.addr %s335, 8
        %s337 = scalar_lea.vmem %s7, %s336
        %p338 = scmp.lt.s32.totalorder %s23, 1
        %s339 = scalar_select %p338, %s23, 1
        %s340 = smul.addr %s339, 2
        %s341 = smul.addr %s340, 8
        %s342 = scalar_lea.vmem %s7, %s341
        %vm344 = vcmask 146432
        %345 = vst.msk [vmem:[#allocation2] sm:$0xff] %vm344, 0.0
        %346 = vst.msk [vmem:[#allocation2 + $0x8] sm:$0xff] %vm344, 0.0
        %vm347 = vcmask 140288
        %348 = vst.msk [vmem:[#allocation2 + $0x10] sm:$0x3] %vm347, 0.0
        %349 = vst [vmem:[#allocation3] sm:$0xff] 0.0
        %350 = vst [vmem:[#allocation3 + $0x8] sm:$0xff] 0.0
        %vm351 = vcmask 261120
        %352 = vst.msk [vmem:[#allocation3 + $0x10] sm:$0xff] %vm351, 0.0
        %353 = vst [vmem:[#allocation3 + $0x18] sm:$0xff] 0.0
        %354 = vst [vmem:[#allocation3 + $0x20] sm:$0xff] 0.0
        %355 = vst.msk [vmem:[#allocation3 + $0x28] sm:$0xff] %vm351, 0.0
        %356 = vst [vmem:[#allocation3 + $0x30] sm:$0x3] 0.0
        %357 = vst [vmem:[#allocation3 + $0x38] sm:$0x3] 0.0
        %vm358 = vcmask 254976
        %359 = vst.msk [vmem:[#allocation3 + $0x40] sm:$0x3] %vm358, 0.0
        %v360 = vld [vmem:[%s295] sm:$0xff]
        %v361 = vld [vmem:[%s295 + $0x8] sm:$0xff]
        %364 = vrot.lane.b32.xlu0 %v360, 1
        %v365 = vpop.permute.xlu0 %364
        %366 = vrot.lane.b32.xlu0 %v361, 1
        %v367 = vpop.permute.xlu0 %366
        %vm370 = vcmask 138248
        %371 = vst.msk [vmem:[#allocation2 + $0x1] sm:$0xff] %vm370, %v365
        %372 = vst.msk [vmem:[#allocation2 + $0x9] sm:$0xff] %vm370, %v367
        %v373 = vld [vmem:[#allocation2] sm:$0xff]
        %v374 = vld [vmem:[#allocation2 + $0x8] sm:$0xff]
        %v375 = vld [vmem:[#allocation2 + $0x1] sm:$0xff]
        %v376 = vld [vmem:[#allocation2 + $0x9] sm:$0xff]
        %v377 = vld [vmem:[#allocation2 + $0x2] sm:$0xff]
        %v378 = vld [vmem:[#allocation2 + $0xa] sm:$0xff]
        %v379 = vld [vmem:[#allocation6] sm:$0xff]
        %v380 = vld [vmem:[#allocation6 + $0x8] sm:$0xff]
        %v381 = vld [vmem:[#allocation6 + $0x10] sm:$0xff]
        %v382 = vld [vmem:[#allocation6 + $0x18] sm:$0xff]
        %v383 = vld [vmem:[#allocation6 + $0x20] sm:$0x3]
        %v384 = vld [vmem:[#allocation6 + $0x28] sm:$0x3]
        %s385 = scalar_lea.vmem [#allocation6], 48
        %v386 = vld [vmem:[%s385] sm:$0xff]
        %v387 = vld [vmem:[%s385 + $0x8] sm:$0xff]
        %v388 = vld [vmem:[%s385 + $0x10] sm:$0xff]
        %v389 = vld [vmem:[%s385 + $0x18] sm:$0xff]
        %v390 = vld [vmem:[%s385 + $0x20] sm:$0x3]
        %v391 = vld [vmem:[%s385 + $0x28] sm:$0x3]
        %v393 = vsel %vm344, %v375, 0
        %v396 = vsel %vm344, %v376, 0
        %vm398 = vcmask 1041408
        %v400 = vsel %vm398, %v390, 0
        %v403 = vsel %vm398, %v391, 0
        %405 = vmatprep.subr.mxu0 %v387
        %406 = vmatpush1.msra.mxu0 %v386
        %407 = vmatprep.subr.mxu0 %v389
        %408 = vmatpush1.msra.mxu0 %v388
        %409 = vmatprep.subr.mxu0 %v403
        %410 = vmatpush1.msra.mxu0 %v400
        %411 = vmatprep.subr.mxu0 0.0
        %412 = vmatpush1.msra.mxu0 0.0
        %413 = vmatprep.subr.mxu0 0.0
        %414 = vmatpush1.msra.mxu0 0.0
        %415 = vmatprep.subr.mxu0 0.0
        %416 = vmatpush1.msra.mxu0 0.0
        %417 = vmatprep.subr.mxu0 0.0
        %418 = vmatpush1.msra.mxu0 0.0
        %419 = vmatprep.subr.mxu0 0.0
        %420 = vmatpush1.msra.mxu0 0.0
        %421 = vmatprep.subr.mxu0 0.0
        %422 = vmatpush1.msra.mxu0 0.0
        %423 = vmatprep.subr.mxu0 0.0
        %424 = vmatpush1.msra.mxu0 0.0
        %425 = vmatprep.subr.mxu0 0.0
        %426 = vmatpush1.msra.mxu0 0.0
        %427 = vmatprep.subr.mxu0 0.0
        %428 = vmatpush1.msra.mxu0 0.0
        %429 = vmatprep.subr.mxu0 0.0
        %430 = vmatpush1.msra.mxu0 0.0
        %431 = vmatprep.subr.mxu0 0.0
        %432 = vmatpush1.msra.mxu0 0.0
        %433 = vmatprep.subr.mxu0 0.0
        %434 = vmatpush1.msra.mxu0 0.0
        %435 = vmatprep.subr.mxu0 0.0
        %436 = vmatpush1.msra.mxu0 0.0
        %437 = vmatprep.subr.mxu0 0.0
        %438 = vmatpush1.msra.mxu0 0.0
        %439 = vmatprep.subr.mxu0 0.0
        %440 = vmatpush1.msra.mxu0 0.0
        %441 = vmatprep.subr.mxu0 0.0
        %442 = vmatpush1.msra.mxu0 0.0
        %443 = vmatprep.subr.mxu0 0.0
        %444 = vmatpush1.msra.mxu0 0.0
        %445 = vmatprep.subr.mxu0 0.0
        %446 = vmatpush1.msra.mxu0 0.0
        %447 = vmatprep.subr.mxu0 0.0
        %448 = vmatpush1.msra.mxu0 0.0
        %449 = vmatprep.subr.mxu0 0.0
        %450 = vmatpush1.msra.mxu0 0.0
        %451 = vmatprep.subr.mxu0 0.0
        %452 = vmatpush1.msra.mxu0 0.0
        %453 = vmatprep.subr.mxu0 0.0
        %454 = vmatpush1.msra.mxu0 0.0
        %455 = vmatprep.subr.mxu0 0.0
        %456 = vmatpush1.msra.mxu0 0.0
        %457 = vmatprep.subr.mxu0 0.0
        %458 = vmatpush1.msra.mxu0 0.0
        %459 = vmatprep.subr.mxu0 0.0
        %460 = vmatpush1.msra.mxu0 0.0
        %461 = vmatprep.subr.mxu0 0.0
        %462 = vmatpush1.msra.mxu0 0.0
        %463 = vmatprep.subr.mxu0 0.0
        %464 = vmatpush1.msra.mxu0 0.0
        %465 = vmatprep.subr.mxu0 0.0
        %466 = vmatpush1.msra.mxu0 0.0
        %467 = vmatprep.subr.mxu0 0.0
        %468 = vmatpush1.msra.mxu0 0.0
        %469 = vmatprep.mubr.f32.mxu0 0.0
        %470 = vmatmul.mubr.f32.gmra.mrb[0].mxu0 %v393
        %v471 = vpop.f32.mrb[0].mxu0
        %v472 = vadd.f32 0.0, %v471
        %v473 = vpop.f32.mrb[0].mxu0
        %v474 = vadd.f32 0.0, %v473
        %475 = vmatprep.mubr.f32.mxu0 0.0
        %476 = vmatmul.mubr.f32.gmra.mrb[0].mxu0 %v396
        %v477 = vpop.f32.mrb[0].mxu0
        %v478 = vadd.f32 0.0, %v477
        %v479 = vpop.f32.mrb[0].mxu0
        %v480 = vadd.f32 0.0, %v479
        %481 = vdwg.mxu0
        %v483 = vsel %vm344, %v373, 0
        %v486 = vsel %vm344, %v374, 0
        %v489 = vsel %vm398, %v383, 0
        %v492 = vsel %vm398, %v384, 0
        %494 = vmatprep.subr.mxu0 %v380
        %495 = vmatpush1.msra.mxu0 %v379
        %496 = vmatprep.subr.mxu0 %v382
        %497 = vmatpush1.msra.mxu0 %v381
        %498 = vmatprep.subr.mxu0 %v492
        %499 = vmatpush1.msra.mxu0 %v489
        %500 = vmatprep.subr.mxu0 0.0
        %501 = vmatpush1.msra.mxu0 0.0
        %502 = vmatprep.subr.mxu0 0.0
        %503 = vmatpush1.msra.mxu0 0.0
        %504 = vmatprep.subr.mxu0 0.0
        %505 = vmatpush1.msra.mxu0 0.0
        %506 = vmatprep.subr.mxu0 0.0
        %507 = vmatpush1.msra.mxu0 0.0
        %508 = vmatprep.subr.mxu0 0.0
        %509 = vmatpush1.msra.mxu0 0.0
        %510 = vmatprep.subr.mxu0 0.0
        %511 = vmatpush1.msra.mxu0 0.0
        %512 = vmatprep.subr.mxu0 0.0
        %513 = vmatpush1.msra.mxu0 0.0
        %514 = vmatprep.subr.mxu0 0.0
        %515 = vmatpush1.msra.mxu0 0.0
        %516 = vmatprep.subr.mxu0 0.0
        %517 = vmatpush1.msra.mxu0 0.0
        %518 = vmatprep.subr.mxu0 0.0
        %519 = vmatpush1.msra.mxu0 0.0
        %520 = vmatprep.subr.mxu0 0.0
        %521 = vmatpush1.msra.mxu0 0.0
        %522 = vmatprep.subr.mxu0 0.0
        %523 = vmatpush1.msra.mxu0 0.0
        %524 = vmatprep.subr.mxu0 0.0
        %525 = vmatpush1.msra.mxu0 0.0
        %526 = vmatprep.subr.mxu0 0.0
        %527 = vmatpush1.msra.mxu0 0.0
        %528 = vmatprep.subr.mxu0 0.0
        %529 = vmatpush1.msra.mxu0 0.0
        %530 = vmatprep.subr.mxu0 0.0
        %531 = vmatpush1.msra.mxu0 0.0
        %532 = vmatprep.subr.mxu0 0.0
        %533 = vmatpush1.msra.mxu0 0.0
        %534 = vmatprep.subr.mxu0 0.0
        %535 = vmatpush1.msra.mxu0 0.0
        %536 = vmatprep.subr.mxu0 0.0
        %537 = vmatpush1.msra.mxu0 0.0
        %538 = vmatprep.subr.mxu0 0.0
        %539 = vmatpush1.msra.mxu0 0.0
        %540 = vmatprep.subr.mxu0 0.0
        %541 = vmatpush1.msra.mxu0 0.0
        %542 = vmatprep.subr.mxu0 0.0
        %543 = vmatpush1.msra.mxu0 0.0
        %544 = vmatprep.subr.mxu0 0.0
        %545 = vmatpush1.msra.mxu0 0.0
        %546 = vmatprep.subr.mxu0 0.0
        %547 = vmatpush1.msra.mxu0 0.0
        %548 = vmatprep.subr.mxu0 0.0
        %549 = vmatpush1.msra.mxu0 0.0
        %550 = vmatprep.subr.mxu0 0.0
        %551 = vmatpush1.msra.mxu0 0.0
        %552 = vmatprep.subr.mxu0 0.0
        %553 = vmatpush1.msra.mxu0 0.0
        %554 = vmatprep.subr.mxu0 0.0
        %555 = vmatpush1.msra.mxu0 0.0
        %556 = vmatprep.subr.mxu0 0.0
        %557 = vmatpush1.msra.mxu0 0.0
        %558 = vmatprep.mubr.f32.mxu0 0.0
        %559 = vmatmul.mubr.f32.gmra.mrb[0].mxu0 %v483
        %v560 = vpop.f32.mrb[0].mxu0
        %v561 = vadd.f32 %v472, %v560
        %v562 = vpop.f32.mrb[0].mxu0
        %v563 = vadd.f32 %v474, %v562
        %564 = vmatprep.mubr.f32.mxu0 0.0
        %565 = vmatmul.mubr.f32.gmra.mrb[0].mxu0 %v486
        %v566 = vpop.f32.mrb[0].mxu0
        %v567 = vadd.f32 %v478, %v566
        %v568 = vpop.f32.mrb[0].mxu0
        %v569 = vadd.f32 %v480, %v568
        %570 = vdwg.mxu0
        %s571 = scalar_lea.vmem [#allocation6], 96
        %v572 = vld [vmem:[%s571] sm:$0xff]
        %v573 = vld [vmem:[%s571 + $0x8] sm:$0xff]
        %v574 = vld [vmem:[%s571 + $0x10] sm:$0xff]
        %v575 = vld [vmem:[%s571 + $0x18] sm:$0xff]
        %v576 = vld [vmem:[%s571 + $0x20] sm:$0x3]
        %v577 = vld [vmem:[%s571 + $0x28] sm:$0x3]
        %v579 = vsel %vm344, %v377, 0
        %v582 = vsel %vm344, %v378, 0
        %v585 = vsel %vm398, %v576, 0
        %v588 = vsel %vm398, %v577, 0
        %590 = vmatprep.subr.mxu0 %v573
        %591 = vmatpush1.msra.mxu0 %v572
        %592 = vmatprep.subr.mxu0 %v575
        %593 = vmatpush1.msra.mxu0 %v574
        %594 = vmatprep.subr.mxu0 %v588
        %595 = vmatpush1.msra.mxu0 %v585
        %596 = vmatprep.subr.mxu0 0.0
        %597 = vmatpush1.msra.mxu0 0.0
        %598 = vmatprep.subr.mxu0 0.0
        %599 = vmatpush1.msra.mxu0 0.0
        %600 = vmatprep.subr.mxu0 0.0
        %601 = vmatpush1.msra.mxu0 0.0
        %602 = vmatprep.subr.mxu0 0.0
        %603 = vmatpush1.msra.mxu0 0.0
        %604 = vmatprep.subr.mxu0 0.0
        %605 = vmatpush1.msra.mxu0 0.0
        %606 = vmatprep.subr.mxu0 0.0
        %607 = vmatpush1.msra.mxu0 0.0
        %608 = vmatprep.subr.mxu0 0.0
        %609 = vmatpush1.msra.mxu0 0.0
        %610 = vmatprep.subr.mxu0 0.0
        %611 = vmatpush1.msra.mxu0 0.0
        %612 = vmatprep.subr.mxu0 0.0
        %613 = vmatpush1.msra.mxu0 0.0
        %614 = vmatprep.subr.mxu0 0.0
        %615 = vmatpush1.msra.mxu0 0.0
        %616 = vmatprep.subr.mxu0 0.0
        %617 = vmatpush1.msra.mxu0 0.0
        %618 = vmatprep.subr.mxu0 0.0
        %619 = vmatpush1.msra.mxu0 0.0
        %620 = vmatprep.subr.mxu0 0.0
        %621 = vmatpush1.msra.mxu0 0.0
        %622 = vmatprep.subr.mxu0 0.0
        %623 = vmatpush1.msra.mxu0 0.0
        %624 = vmatprep.subr.mxu0 0.0
        %625 = vmatpush1.msra.mxu0 0.0
        %626 = vmatprep.subr.mxu0 0.0
        %627 = vmatpush1.msra.mxu0 0.0
        %628 = vmatprep.subr.mxu0 0.0
        %629 = vmatpush1.msra.mxu0 0.0
        %630 = vmatprep.subr.mxu0 0.0
        %631 = vmatpush1.msra.mxu0 0.0
        %632 = vmatprep.subr.mxu0 0.0
        %633 = vmatpush1.msra.mxu0 0.0
        %634 = vmatprep.subr.mxu0 0.0
        %635 = vmatpush1.msra.mxu0 0.0
        %636 = vmatprep.subr.mxu0 0.0
        %637 = vmatpush1.msra.mxu0 0.0
        %638 = vmatprep.subr.mxu0 0.0
        %639 = vmatpush1.msra.mxu0 0.0
        %640 = vmatprep.subr.mxu0 0.0
        %641 = vmatpush1.msra.mxu0 0.0
        %642 = vmatprep.subr.mxu0 0.0
        %643 = vmatpush1.msra.mxu0 0.0
        %644 = vmatprep.subr.mxu0 0.0
        %645 = vmatpush1.msra.mxu0 0.0
        %646 = vmatprep.subr.mxu0 0.0
        %647 = vmatpush1.msra.mxu0 0.0
        %648 = vmatprep.subr.mxu0 0.0
        %649 = vmatpush1.msra.mxu0 0.0
        %650 = vmatprep.subr.mxu0 0.0
        %651 = vmatpush1.msra.mxu0 0.0
        %652 = vmatprep.subr.mxu0 0.0
        %653 = vmatpush1.msra.mxu0 0.0
        %654 = vmatprep.mubr.f32.mxu0 0.0
        %655 = vmatmul.mubr.f32.gmra.mrb[0].mxu0 %v579
        %v656 = vpop.f32.mrb[0].mxu0
        %v657 = vadd.f32 0.0, %v656
        %v658 = vpop.f32.mrb[0].mxu0
        %v659 = vadd.f32 0.0, %v658
        %660 = vmatprep.mubr.f32.mxu0 0.0
        %661 = vmatmul.mubr.f32.gmra.mrb[0].mxu0 %v582
        %v662 = vpop.f32.mrb[0].mxu0
        %v663 = vadd.f32 0.0, %v662
        %v664 = vpop.f32.mrb[0].mxu0
        %v665 = vadd.f32 0.0, %v664
        %666 = vdwg.mxu0
        %v667 = vadd.f32 %v561, %v657
        %v668 = vadd.f32 %v563, %v659
        %v669 = vadd.f32 %v567, %v663
        %v670 = vadd.f32 %v569, %v665
        %v671 = vld [vmem:[%s2] sm:$0x3]
        %v673 = vlaneseq
        %v674 = vshrl.u32 %v673, 7
        %v675 = vsub.s32 0, %v674
        %v676 = vrot.slane %v671, %v675
        %v677 = vlaneseq
        %v678 = vshrl.u32 %v677, 7
        %v679 = vsub.s32 1, %v678
        %v680 = vrot.slane %v671, %v679
        %v683 = vadd.f32 %v667, %v676
        %v684 = vadd.f32 %v668, %v680
        %v685 = vadd.f32 %v669, %v676
        %v686 = vadd.f32 %v670, %v680
        %v687 = vmax.f32 %v683, 0.0
        %v688 = vmax.f32 %v684, 0.0
        %v689 = vmax.f32 %v685, 0.0
        %v690 = vmax.f32 %v686, 0.0
        %vm695 = vcmask 1040384
        %v696 = vrot.slane %v687, 7
        %v697 = vrot.slane %v688, 7
        %v698 = vrot.slane %v689, 7
        %v699 = vsel %vm695, %v696, %v698
        %v700 = vrot.slane %v690, 7
        %v701 = vsel %vm695, %v697, %v700
        %702 = vrot.lane.b32.xlu0 %v696, 16
        %v703 = vpop.permute.xlu0 %702
        %704 = vrot.lane.b32.xlu0 %v697, 16
        %v705 = vpop.permute.xlu0 %704
        %706 = vrot.lane.b32.xlu0 %v699, 16
        %v707 = vpop.permute.xlu0 %706
        %708 = vrot.lane.b32.xlu0 %v701, 16
        %v709 = vpop.permute.xlu0 %708
        %710 = vrot.lane.b32.xlu0 %v698, 16
        %v711 = vpop.permute.xlu0 %710
        %712 = vrot.lane.b32.xlu0 %v700, 16
        %v713 = vpop.permute.xlu0 %712
        %vm714 = vcmask 130048
        %v715 = vsel %vm714, %v703, %v705
        %v716 = vsel %vm714, %v707, %v709
        %v717 = vsel %vm714, %v711, %v713
        %vm727 = vcmask 1047681
        %728 = vst.msk [vmem:[#allocation3] sm:$0xfe] %vm727, %v703
        %729 = vst [vmem:[#allocation3 + $0x8] sm:$0xfe] %v715
        %vm730 = vcmask 130049
        %731 = vst.msk [vmem:[#allocation3 + $0x10] sm:$0xfe] %vm730, %v705
        %vm732 = vcmask 1047680
        %733 = vst.msk [vmem:[#allocation3 + $0x18] sm:$0xff] %vm732, %v707
        %734 = vst [vmem:[#allocation3 + $0x20] sm:$0xff] %v716
        %735 = vst.msk [vmem:[#allocation3 + $0x28] sm:$0xff] %vm714, %v709
        %vm736 = vcmask 1040512
        %737 = vst.msk [vmem:[#allocation3 + $0x30] sm:$0x1] %vm736, %v711
        %738 = vst [vmem:[#allocation3 + $0x38] sm:$0x1] %v717
        %vm739 = vcmask 122880
        %740 = vst.msk [vmem:[#allocation3 + $0x40] sm:$0x1] %vm739, %v713
        %v741 = vld [vmem:[#allocation3] sm:$0xff]
        %v742 = vld [vmem:[#allocation3 + $0x8] sm:$0xff]
        %v743 = vld [vmem:[#allocation3 + $0x10] sm:$0xff]
        %v744 = vld [vmem:[#allocation3 + $0x18] sm:$0xff]
        %v745 = vld [vmem:[#allocation3 + $0x20] sm:$0xff]
        %v746 = vld [vmem:[#allocation3 + $0x28] sm:$0xff]
        %v747 = vpack.c.bf16 %v744, %v741
        %v748 = vpack.c.bf16 %v745, %v742
        %v749 = vpack.c.bf16 %v746, %v743
        %v750 = vld [vmem:[#allocation3] sm:$0xfe]
        %v751 = vld [vmem:[#allocation3 + $0x8] sm:$0xfe]
        %v752 = vld [vmem:[#allocation3 + $0x10] sm:$0xfe]
        %v753 = vld [vmem:[#allocation3 + $0x30] sm:$0x1]
        %v754 = vld [vmem:[#allocation3 + $0x38] sm:$0x1]
        %v755 = vld [vmem:[#allocation3 + $0x40] sm:$0x1]
        %v756 = vpack.c.bf16 %v744, %v750
        %v757 = vpack.c.bf16 %v745, %v751
        %v758 = vpack.c.bf16 %v746, %v752
        %v759 = vpack.c.bf16 %v753, %v753
        %v760 = vpack.c.bf16 %v754, %v754
        %v761 = vpack.c.bf16 %v755, %v755
        %v762 = vld [vmem:[#allocation3] sm:$0xfc]
        %v763 = vld [vmem:[#allocation3 + $0x8] sm:$0xfc]
        %v764 = vld [vmem:[#allocation3 + $0x10] sm:$0xfc]
        %v765 = vld [vmem:[#allocation3 + $0x30] sm:$0x3]
        %v766 = vld [vmem:[#allocation3 + $0x38] sm:$0x3]
        %v767 = vld [vmem:[#allocation3 + $0x40] sm:$0x3]
        %v768 = vpack.c.bf16 %v744, %v762
        %v769 = vpack.c.bf16 %v745, %v763
        %v770 = vpack.c.bf16 %v746, %v764
        %v771 = vpack.c.bf16 %v765, %v765
        %v772 = vpack.c.bf16 %v766, %v766
        %v773 = vpack.c.bf16 %v767, %v767
        %v774 = vld [vmem:[#allocation8] sm:$0xff]
        %v775 = vld [vmem:[#allocation8 + $0x8] sm:$0xff]
        %v776 = vld [vmem:[#allocation8 + $0x10] sm:$0xff]
        %v777 = vld [vmem:[#allocation8 + $0x18] sm:$0xff]
        %v778 = vld [vmem:[#allocation8 + $0x20] sm:$0xff]
        %v779 = vld [vmem:[#allocation8 + $0x28] sm:$0xff]
        %v780 = vld [vmem:[#allocation8 + $0x30] sm:$0xff]
        %v781 = vld [vmem:[#allocation8 + $0x38] sm:$0xff]
        %v782 = vld [vmem:[#allocation8 + $0x40] sm:$0xff]
        %v783 = vld [vmem:[#allocation8 + $0x48] sm:$0xff]
        %v784 = vld [vmem:[#allocation8 + $0x50] sm:$0xff]
        %v785 = vld [vmem:[#allocation8 + $0x58] sm:$0xff]
        %v786 = vld [vmem:[#allocation8 + $0x60] sm:$0xff]
        %v787 = vld [vmem:[#allocation8 + $0x68] sm:$0xff]
        %v788 = vld [vmem:[#allocation8 + $0x70] sm:$0xff]
        %v789 = vld [vmem:[#allocation8 + $0x78] sm:$0xff]
        %v790 = vld [vmem:[#allocation8 + $0x80] sm:$0xff]
        %v791 = vld [vmem:[#allocation8 + $0x88] sm:$0xff]
        %v792 = vld [vmem:[#allocation8 + $0x90] sm:$0xff]
        %v793 = vld [vmem:[#allocation8 + $0x98] sm:$0xff]
        %v794 = vld [vmem:[#allocation8 + $0xa0] sm:$0xff]
        %v795 = vld [vmem:[#allocation8 + $0xa8] sm:$0xff]
        %v796 = vld [vmem:[#allocation8 + $0xb0] sm:$0xff]
        %v797 = vld [vmem:[#allocation8 + $0xb8] sm:$0xff]
        %v798 = vld [vmem:[#allocation8 + $0xc0] sm:$0xff]
        %v799 = vld [vmem:[#allocation8 + $0xc8] sm:$0xff]
        %v800 = vld [vmem:[#allocation8 + $0xd0] sm:$0xff]
        %v801 = vld [vmem:[#allocation8 + $0xd8] sm:$0xff]
        %v802 = vld [vmem:[#allocation8 + $0xe0] sm:$0xff]
        %v803 = vld [vmem:[#allocation8 + $0xe8] sm:$0xff]
        %v804 = vld [vmem:[#allocation8 + $0xf0] sm:$0xff]
        %v805 = vld [vmem:[#allocation8 + $0xf8] sm:$0xff]
        %v806 = vld [vmem:[#allocation8 + $0x100] sm:$0xff]
        %v807 = vld [vmem:[#allocation8 + $0x108] sm:$0xff]
        %v808 = vld [vmem:[#allocation8 + $0x110] sm:$0xff]
        %v809 = vld [vmem:[#allocation8 + $0x118] sm:$0xff]
        %s810 = scalar_lea.vmem [#allocation8], 288
        %v811 = vld [vmem:[%s810] sm:$0xff]
        %v812 = vld [vmem:[%s810 + $0x8] sm:$0xff]
        %v813 = vld [vmem:[%s810 + $0x10] sm:$0xff]
        %v814 = vld [vmem:[%s810 + $0x18] sm:$0xff]
        %v815 = vld [vmem:[%s810 + $0x20] sm:$0xff]
        %v816 = vld [vmem:[%s810 + $0x28] sm:$0xff]
        %v817 = vld [vmem:[%s810 + $0x30] sm:$0xff]
        %v818 = vld [vmem:[%s810 + $0x38] sm:$0xff]
        %v819 = vld [vmem:[%s810 + $0x40] sm:$0xff]
        %v820 = vld [vmem:[%s810 + $0x48] sm:$0xff]
        %v821 = vld [vmem:[%s810 + $0x50] sm:$0xff]
        %v822 = vld [vmem:[%s810 + $0x58] sm:$0xff]
        %v823 = vld [vmem:[%s810 + $0x60] sm:$0xff]
        %v824 = vld [vmem:[%s810 + $0x68] sm:$0xff]
        %v825 = vld [vmem:[%s810 + $0x70] sm:$0xff]
        %v826 = vld [vmem:[%s810 + $0x78] sm:$0xff]
        %v827 = vld [vmem:[%s810 + $0x80] sm:$0xff]
        %v828 = vld [vmem:[%s810 + $0x88] sm:$0xff]
        %v829 = vld [vmem:[%s810 + $0x90] sm:$0xff]
        %v830 = vld [vmem:[%s810 + $0x98] sm:$0xff]
        %v831 = vld [vmem:[%s810 + $0xa0] sm:$0xff]
        %v832 = vld [vmem:[%s810 + $0xa8] sm:$0xff]
        %v833 = vld [vmem:[%s810 + $0xb0] sm:$0xff]
        %v834 = vld [vmem:[%s810 + $0xb8] sm:$0xff]
        %v835 = vld [vmem:[%s810 + $0xc0] sm:$0xff]
        %v836 = vld [vmem:[%s810 + $0xc8] sm:$0xff]
        %v837 = vld [vmem:[%s810 + $0xd0] sm:$0xff]
        %v838 = vld [vmem:[%s810 + $0xd8] sm:$0xff]
        %v839 = vld [vmem:[%s810 + $0xe0] sm:$0xff]
        %v840 = vld [vmem:[%s810 + $0xe8] sm:$0xff]
        %v841 = vld [vmem:[%s810 + $0xf0] sm:$0xff]
        %v842 = vld [vmem:[%s810 + $0xf8] sm:$0xff]
        %v843 = vld [vmem:[%s810 + $0x100] sm:$0xff]
        %v844 = vld [vmem:[%s810 + $0x108] sm:$0xff]
        %v845 = vld [vmem:[%s810 + $0x110] sm:$0xff]
        %v846 = vld [vmem:[%s810 + $0x118] sm:$0xff]
        %vm847 = vsmask.f32 7424
        %v849 = vshrl.u32 %v756, 16
        %v851 = vshll.u32 %v756, 16
        %v853 = vrot.slane %v851, 1
        %v854 = vor.u32 %v849, %v853
        %v856 = vshll.u32 %v759, 16
        %v858 = vrot.slane %v856, 1
        %v859 = vsel %vm847, %v854, %v858
        %v861 = vshrl.u32 %v757, 16
        %v863 = vshll.u32 %v757, 16
        %v865 = vrot.slane %v863, 1
        %v866 = vor.u32 %v861, %v865
        %v868 = vshll.u32 %v760, 16
        %v870 = vrot.slane %v868, 1
        %v871 = vsel %vm847, %v866, %v870
        %v873 = vshrl.u32 %v758, 16
        %v875 = vshll.u32 %v758, 16
        %v877 = vrot.slane %v875, 1
        %v878 = vor.u32 %v873, %v877
        %v880 = vshll.u32 %v761, 16
        %v882 = vrot.slane %v880, 1
        %v883 = vsel %vm847, %v878, %v882
        %v922 = vunpack.c.l.b16 %v811
        %v923 = vunpack.c.h.b16 %v811
        %v924 = vunpack.c.l.b16 %v812
        %v925 = vunpack.c.h.b16 %v812
        %v926 = vunpack.c.l.b16 %v813
        %v927 = vunpack.c.h.b16 %v813
        %v928 = vunpack.c.l.b16 %v814
        %v929 = vunpack.c.h.b16 %v814
        %v930 = vunpack.c.l.b16 %v815
        %v931 = vunpack.c.h.b16 %v815
        %v932 = vunpack.c.l.b16 %v816
        %v933 = vunpack.c.h.b16 %v816
        %v934 = vunpack.c.l.b16 %v817
        %v935 = vunpack.c.h.b16 %v817
        %v936 = vunpack.c.l.b16 %v818
        %v937 = vunpack.c.h.b16 %v818
        %v938 = vunpack.c.l.b16 %v819
        %v939 = vunpack.c.h.b16 %v819
        %v940 = vunpack.c.l.b16 %v820
        %v941 = vunpack.c.h.b16 %v820
        %v942 = vunpack.c.l.b16 %v821
        %v943 = vunpack.c.h.b16 %v821
        %v944 = vunpack.c.l.b16 %v822
        %v945 = vunpack.c.h.b16 %v822
        %v946 = vunpack.c.l.b16 %v823
        %v947 = vunpack.c.h.b16 %v823
        %v948 = vunpack.c.l.b16 %v824
        %v949 = vunpack.c.h.b16 %v824
        %v950 = vunpack.c.l.b16 %v825
        %v951 = vunpack.c.h.b16 %v825
        %v952 = vunpack.c.l.b16 %v826
        %v953 = vunpack.c.h.b16 %v826
        %v954 = vunpack.c.l.b16 %v827
        %v955 = vunpack.c.h.b16 %v827
        %v956 = vunpack.c.l.b16 %v828
        %v957 = vunpack.c.h.b16 %v828
        %v958 = vunpack.c.l.b16 %v829
        %v959 = vunpack.c.h.b16 %v829
        %v960 = vunpack.c.l.b16 %v830
        %v961 = vunpack.c.h.b16 %v830
        %v962 = vunpack.c.l.b16 %v831
        %v963 = vunpack.c.h.b16 %v831
        %v964 = vunpack.c.l.b16 %v832
        %v965 = vunpack.c.h.b16 %v832
        %v966 = vunpack.c.l.b16 %v833
        %v967 = vunpack.c.h.b16 %v833
        %v968 = vunpack.c.l.b16 %v834
        %v969 = vunpack.c.h.b16 %v834
        %v970 = vunpack.c.l.b16 %v835
        %v971 = vunpack.c.h.b16 %v835
        %v972 = vunpack.c.l.b16 %v836
        %v973 = vunpack.c.h.b16 %v836
        %v974 = vunpack.c.l.b16 %v837
        %v975 = vunpack.c.h.b16 %v837
        %v976 = vunpack.c.l.b16 %v838
        %v977 = vunpack.c.h.b16 %v838
        %v978 = vunpack.c.l.b16 %v839
        %v979 = vunpack.c.h.b16 %v839
        %v980 = vunpack.c.l.b16 %v840
        %v981 = vunpack.c.h.b16 %v840
        %v982 = vunpack.c.l.b16 %v841
        %v983 = vunpack.c.h.b16 %v841
        %v984 = vunpack.c.l.b16 %v842
        %v985 = vunpack.c.h.b16 %v842
        %v986 = vunpack.c.l.b16 %v843
        %v987 = vunpack.c.h.b16 %v843
        %v988 = vunpack.c.l.b16 %v844
        %v989 = vunpack.c.h.b16 %v844
        %v990 = vunpack.c.l.b16 %v845
        %v991 = vunpack.c.h.b16 %v845
        %v992 = vunpack.c.l.b16 %v846
        %v993 = vunpack.c.h.b16 %v846
        %v994 = vpack.c.b16 %v924, %v922
        %v995 = vpack.c.b16 %v925, %v923
        %v996 = vpack.c.b16 %v928, %v926
        %v997 = vpack.c.b16 %v929, %v927
        %v998 = vpack.c.b16 %v932, %v930
        %v999 = vpack.c.b16 %v933, %v931
        %v1000 = vpack.c.b16 %v936, %v934
        %v1001 = vpack.c.b16 %v937, %v935
        %v1002 = vpack.c.b16 %v940, %v938
        %v1003 = vpack.c.b16 %v941, %v939
        %v1004 = vpack.c.b16 %v944, %v942
        %v1005 = vpack.c.b16 %v945, %v943
        %v1006 = vpack.c.b16 %v948, %v946
        %v1007 = vpack.c.b16 %v949, %v947
        %v1008 = vpack.c.b16 %v952, %v950
        %v1009 = vpack.c.b16 %v953, %v951
        %v1010 = vpack.c.b16 %v956, %v954
        %v1011 = vpack.c.b16 %v957, %v955
        %v1012 = vpack.c.b16 %v960, %v958
        %v1013 = vpack.c.b16 %v961, %v959
        %v1014 = vpack.c.b16 %v964, %v962
        %v1015 = vpack.c.b16 %v965, %v963
        %v1016 = vpack.c.b16 %v968, %v966
        %v1017 = vpack.c.b16 %v969, %v967
        %v1018 = vpack.c.b16 %v972, %v970
        %v1019 = vpack.c.b16 %v973, %v971
        %v1020 = vpack.c.b16 %v976, %v974
        %v1021 = vpack.c.b16 %v977, %v975
        %v1022 = vpack.c.b16 %v980, %v978
        %v1023 = vpack.c.b16 %v981, %v979
        %v1024 = vpack.c.b16 %v984, %v982
        %v1025 = vpack.c.b16 %v985, %v983
        %v1026 = vpack.c.b16 %v988, %v986
        %v1027 = vpack.c.b16 %v989, %v987
        %v1028 = vpack.c.b16 %v992, %v990
        %v1029 = vpack.c.b16 %v993, %v991
        %v1067 = vsel %vm351, %v883, 0
        %1069 = vmatprep.subr.bf16.mxu0 %v995
        %1070 = vmatpush1.bf16.msra.mxu0 %v994
        %1071 = vmatprep.subr.bf16.mxu0 %v997
        %1072 = vmatpush1.bf16.msra.mxu0 %v996
        %1073 = vmatprep.subr.bf16.mxu0 %v999
        %1074 = vmatpush1.bf16.msra.mxu0 %v998
        %1075 = vmatprep.subr.bf16.mxu0 %v1001
        %1076 = vmatpush1.bf16.msra.mxu0 %v1000
        %1077 = vmatprep.subr.bf16.mxu0 %v1003
        %1078 = vmatpush1.bf16.msra.mxu0 %v1002
        %1079 = vmatprep.subr.bf16.mxu0 %v1005
        %1080 = vmatpush1.bf16.msra.mxu0 %v1004
        %1081 = vmatprep.subr.bf16.mxu0 %v1007
        %1082 = vmatpush1.bf16.msra.mxu0 %v1006
        %1083 = vmatprep.subr.bf16.mxu0 %v1009
        %1084 = vmatpush1.bf16.msra.mxu0 %v1008
        %1085 = vmatprep.subr.bf16.mxu0 %v1011
        %1086 = vmatpush1.bf16.msra.mxu0 %v1010
        %1087 = vmatprep.subr.bf16.mxu0 %v1013
        %1088 = vmatpush1.bf16.msra.mxu0 %v1012
        %1089 = vmatprep.subr.bf16.mxu0 %v1015
        %1090 = vmatpush1.bf16.msra.mxu0 %v1014
        %1091 = vmatprep.subr.bf16.mxu0 %v1017
        %1092 = vmatpush1.bf16.msra.mxu0 %v1016
        %1093 = vmatprep.subr.bf16.mxu0 %v1019
        %1094 = vmatpush1.bf16.msra.mxu0 %v1018
        %1095 = vmatprep.subr.bf16.mxu0 %v1021
        %1096 = vmatpush1.bf16.msra.mxu0 %v1020
        %1097 = vmatprep.subr.bf16.mxu0 %v1023
        %1098 = vmatpush1.bf16.msra.mxu0 %v1022
        %1099 = vmatprep.subr.bf16.mxu0 %v1025
        %1100 = vmatpush1.bf16.msra.mxu0 %v1024
        %1101 = vmatprep.mubr.bf16.mxu0 %v871
        %1102 = vmatmul.mubr.bf16.gmra.mrb[0].mxu0 %v859
        %v1103 = vpop.f32.mrb[0].mxu0
        %v1104 = vadd.f32 0.0, %v1103
        %v1105 = vpop.f32.mrb[0].mxu0
        %v1106 = vadd.f32 0.0, %v1105
        %v1107 = vpop.f32.mrb[0].mxu0
        %v1108 = vadd.f32 0.0, %v1107
        %v1109 = vpop.f32.mrb[0].mxu0
        %v1110 = vadd.f32 0.0, %v1109
        %1111 = vdwg.mxu0
        %1112 = vmatprep.subr.bf16.mxu0 %v1027
        %1113 = vmatpush1.bf16.msra.mxu0 %v1026
        %1114 = vmatprep.subr.bf16.mxu0 %v1029
        %1115 = vmatpush1.bf16.msra.mxu0 %v1028
        %1116 = vmatprep.subr.bf16.mxu0 0
        %1117 = vmatpush1.bf16.msra.mxu0 0
        %1118 = vmatprep.subr.bf16.mxu0 0
        %1119 = vmatpush1.bf16.msra.mxu0 0
        %1120 = vmatprep.subr.bf16.mxu0 0
        %1121 = vmatpush1.bf16.msra.mxu0 0
        %1122 = vmatprep.subr.bf16.mxu0 0
        %1123 = vmatpush1.bf16.msra.mxu0 0
        %1124 = vmatprep.subr.bf16.mxu0 0
        %1125 = vmatpush1.bf16.msra.mxu0 0
        %1126 = vmatprep.subr.bf16.mxu0 0
        %1127 = vmatpush1.bf16.msra.mxu0 0
        %1128 = vmatprep.subr.bf16.mxu0 0
        %1129 = vmatpush1.bf16.msra.mxu0 0
        %1130 = vmatprep.subr.bf16.mxu0 0
        %1131 = vmatpush1.bf16.msra.mxu0 0
        %1132 = vmatprep.subr.bf16.mxu0 0
        %1133 = vmatpush1.bf16.msra.mxu0 0
        %1134 = vmatprep.subr.bf16.mxu0 0
        %1135 = vmatpush1.bf16.msra.mxu0 0
        %1136 = vmatprep.subr.bf16.mxu0 0
        %1137 = vmatpush1.bf16.msra.mxu0 0
        %1138 = vmatprep.subr.bf16.mxu0 0
        %1139 = vmatpush1.bf16.msra.mxu0 0
        %1140 = vmatprep.subr.bf16.mxu0 0
        %1141 = vmatpush1.bf16.msra.mxu0 0
        %1142 = vmatprep.subr.bf16.mxu0 0
        %1143 = vmatpush1.bf16.msra.mxu0 0
        %1144 = vmatprep.mubr.bf16.mxu0 0
        %1145 = vmatmul.mubr.bf16.gmra.mrb[0].mxu0 %v1067
        %v1146 = vpop.f32.mrb[0].mxu0
        %v1147 = vadd.f32 %v1104, %v1146
        %v1148 = vpop.f32.mrb[0].mxu0
        %v1149 = vadd.f32 %v1106, %v1148
        %v1150 = vpop.f32.mrb[0].mxu0
        %v1151 = vadd.f32 %v1108, %v1150
        %v1152 = vpop.f32.mrb[0].mxu0
        %v1153 = vadd.f32 %v1110, %v1152
        %1154 = vdwg.mxu0
        %v1191 = vunpack.c.l.b16 %v774
        %v1192 = vunpack.c.h.b16 %v774
        %v1193 = vunpack.c.l.b16 %v775
        %v1194 = vunpack.c.h.b16 %v775
        %v1195 = vunpack.c.l.b16 %v776
        %v1196 = vunpack.c.h.b16 %v776
        %v1197 = vunpack.c.l.b16 %v777
        %v1198 = vunpack.c.h.b16 %v777
        %v1199 = vunpack.c.l.b16 %v778
        %v1200 = vunpack.c.h.b16 %v778
        %v1201 = vunpack.c.l.b16 %v779
        %v1202 = vunpack.c.h.b16 %v779
        %v1203 = vunpack.c.l.b16 %v780
        %v1204 = vunpack.c.h.b16 %v780
        %v1205 = vunpack.c.l.b16 %v781
        %v1206 = vunpack.c.h.b16 %v781
        %v1207 = vunpack.c.l.b16 %v782
        %v1208 = vunpack.c.h.b16 %v782
        %v1209 = vunpack.c.l.b16 %v783
        %v1210 = vunpack.c.h.b16 %v783
        %v1211 = vunpack.c.l.b16 %v784
        %v1212 = vunpack.c.h.b16 %v784
        %v1213 = vunpack.c.l.b16 %v785
        %v1214 = vunpack.c.h.b16 %v785
        %v1215 = vunpack.c.l.b16 %v786
        %v1216 = vunpack.c.h.b16 %v786
        %v1217 = vunpack.c.l.b16 %v787
        %v1218 = vunpack.c.h.b16 %v787
        %v1219 = vunpack.c.l.b16 %v788
        %v1220 = vunpack.c.h.b16 %v788
        %v1221 = vunpack.c.l.b16 %v789
        %v1222 = vunpack.c.h.b16 %v789
        %v1223 = vunpack.c.l.b16 %v790
        %v1224 = vunpack.c.h.b16 %v790
        %v1225 = vunpack.c.l.b16 %v791
        %v1226 = vunpack.c.h.b16 %v791
        %v1227 = vunpack.c.l.b16 %v792
        %v1228 = vunpack.c.h.b16 %v792
        %v1229 = vunpack.c.l.b16 %v793
        %v1230 = vunpack.c.h.b16 %v793
        %v1231 = vunpack.c.l.b16 %v794
        %v1232 = vunpack.c.h.b16 %v794
        %v1233 = vunpack.c.l.b16 %v795
        %v1234 = vunpack.c.h.b16 %v795
        %v1235 = vunpack.c.l.b16 %v796
        %v1236 = vunpack.c.h.b16 %v796
        %v1237 = vunpack.c.l.b16 %v797
        %v1238 = vunpack.c.h.b16 %v797
        %v1239 = vunpack.c.l.b16 %v798
        %v1240 = vunpack.c.h.b16 %v798
        %v1241 = vunpack.c.l.b16 %v799
        %v1242 = vunpack.c.h.b16 %v799
        %v1243 = vunpack.c.l.b16 %v800
        %v1244 = vunpack.c.h.b16 %v800
        %v1245 = vunpack.c.l.b16 %v801
        %v1246 = vunpack.c.h.b16 %v801
        %v1247 = vunpack.c.l.b16 %v802
        %v1248 = vunpack.c.h.b16 %v802
        %v1249 = vunpack.c.l.b16 %v803
        %v1250 = vunpack.c.h.b16 %v803
        %v1251 = vunpack.c.l.b16 %v804
        %v1252 = vunpack.c.h.b16 %v804
        %v1253 = vunpack.c.l.b16 %v805
        %v1254 = vunpack.c.h.b16 %v805
        %v1255 = vunpack.c.l.b16 %v806
        %v1256 = vunpack.c.h.b16 %v806
        %v1257 = vunpack.c.l.b16 %v807
        %v1258 = vunpack.c.h.b16 %v807
        %v1259 = vunpack.c.l.b16 %v808
        %v1260 = vunpack.c.h.b16 %v808
        %v1261 = vunpack.c.l.b16 %v809
        %v1262 = vunpack.c.h.b16 %v809
        %v1263 = vpack.c.b16 %v1193, %v1191
        %v1264 = vpack.c.b16 %v1194, %v1192
        %v1265 = vpack.c.b16 %v1197, %v1195
        %v1266 = vpack.c.b16 %v1198, %v1196
        %v1267 = vpack.c.b16 %v1201, %v1199
        %v1268 = vpack.c.b16 %v1202, %v1200
        %v1269 = vpack.c.b16 %v1205, %v1203
        %v1270 = vpack.c.b16 %v1206, %v1204
        %v1271 = vpack.c.b16 %v1209, %v1207
        %v1272 = vpack.c.b16 %v1210, %v1208
        %v1273 = vpack.c.b16 %v1213, %v1211
        %v1274 = vpack.c.b16 %v1214, %v1212
        %v1275 = vpack.c.b16 %v1217, %v1215
        %v1276 = vpack.c.b16 %v1218, %v1216
        %v1277 = vpack.c.b16 %v1221, %v1219
        %v1278 = vpack.c.b16 %v1222, %v1220
        %v1279 = vpack.c.b16 %v1225, %v1223
        %v1280 = vpack.c.b16 %v1226, %v1224
        %v1281 = vpack.c.b16 %v1229, %v1227
        %v1282 = vpack.c.b16 %v1230, %v1228
        %v1283 = vpack.c.b16 %v1233, %v1231
        %v1284 = vpack.c.b16 %v1234, %v1232
        %v1285 = vpack.c.b16 %v1237, %v1235
        %v1286 = vpack.c.b16 %v1238, %v1236
        %v1287 = vpack.c.b16 %v1241, %v1239
        %v1288 = vpack.c.b16 %v1242, %v1240
        %v1289 = vpack.c.b16 %v1245, %v1243
        %v1290 = vpack.c.b16 %v1246, %v1244
        %v1291 = vpack.c.b16 %v1249, %v1247
        %v1292 = vpack.c.b16 %v1250, %v1248
        %v1293 = vpack.c.b16 %v1253, %v1251
        %v1294 = vpack.c.b16 %v1254, %v1252
        %v1295 = vpack.c.b16 %v1257, %v1255
        %v1296 = vpack.c.b16 %v1258, %v1256
        %v1297 = vpack.c.b16 %v1261, %v1259
        %v1298 = vpack.c.b16 %v1262, %v1260
        %v1336 = vsel %vm351, %v749, 0
        %1338 = vmatprep.subr.bf16.mxu0 %v1264
        %1339 = vmatpush1.bf16.msra.mxu0 %v1263
        %1340 = vmatprep.subr.bf16.mxu0 %v1266
        %1341 = vmatpush1.bf16.msra.mxu0 %v1265
        %1342 = vmatprep.subr.bf16.mxu0 %v1268
        %1343 = vmatpush1.bf16.msra.mxu0 %v1267
        %1344 = vmatprep.subr.bf16.mxu0 %v1270
        %1345 = vmatpush1.bf16.msra.mxu0 %v1269
        %1346 = vmatprep.subr.bf16.mxu0 %v1272
        %1347 = vmatpush1.bf16.msra.mxu0 %v1271
        %1348 = vmatprep.subr.bf16.mxu0 %v1274
        %1349 = vmatpush1.bf16.msra.mxu0 %v1273
        %1350 = vmatprep.subr.bf16.mxu0 %v1276
        %1351 = vmatpush1.bf16.msra.mxu0 %v1275
        %1352 = vmatprep.subr.bf16.mxu0 %v1278
        %1353 = vmatpush1.bf16.msra.mxu0 %v1277
        %1354 = vmatprep.subr.bf16.mxu0 %v1280
        %1355 = vmatpush1.bf16.msra.mxu0 %v1279
        %1356 = vmatprep.subr.bf16.mxu0 %v1282
        %1357 = vmatpush1.bf16.msra.mxu0 %v1281
        %1358 = vmatprep.subr.bf16.mxu0 %v1284
        %1359 = vmatpush1.bf16.msra.mxu0 %v1283
        %1360 = vmatprep.subr.bf16.mxu0 %v1286
        %1361 = vmatpush1.bf16.msra.mxu0 %v1285
        %1362 = vmatprep.subr.bf16.mxu0 %v1288
        %1363 = vmatpush1.bf16.msra.mxu0 %v1287
        %1364 = vmatprep.subr.bf16.mxu0 %v1290
        %1365 = vmatpush1.bf16.msra.mxu0 %v1289
        %1366 = vmatprep.subr.bf16.mxu0 %v1292
        %1367 = vmatpush1.bf16.msra.mxu0 %v1291
        %1368 = vmatprep.subr.bf16.mxu0 %v1294
        %1369 = vmatpush1.bf16.msra.mxu0 %v1293
        %1370 = vmatprep.mubr.bf16.mxu0 %v748
        %1371 = vmatmul.mubr.bf16.gmra.mrb[0].mxu0 %v747
        %v1372 = vpop.f32.mrb[0].mxu0
        %v1373 = vadd.f32 %v1147, %v1372
        %v1374 = vpop.f32.mrb[0].mxu0
        %v1375 = vadd.f32 %v1149, %v1374
        %v1376 = vpop.f32.mrb[0].mxu0
        %v1377 = vadd.f32 %v1151, %v1376
        %v1378 = vpop.f32.mrb[0].mxu0
        %v1379 = vadd.f32 %v1153, %v1378
        %1380 = vdwg.mxu0
        %1381 = vmatprep.subr.bf16.mxu0 %v1296
        %1382 = vmatpush1.bf16.msra.mxu0 %v1295
        %1383 = vmatprep.subr.bf16.mxu0 %v1298
        %1384 = vmatpush1.bf16.msra.mxu0 %v1297
        %1385 = vmatprep.subr.bf16.mxu0 0
        %1386 = vmatpush1.bf16.msra.mxu0 0
        %1387 = vmatprep.subr.bf16.mxu0 0
        %1388 = vmatpush1.bf16.msra.mxu0 0
        %1389 = vmatprep.subr.bf16.mxu0 0
        %1390 = vmatpush1.bf16.msra.mxu0 0
        %1391 = vmatprep.subr.bf16.mxu0 0
        %1392 = vmatpush1.bf16.msra.mxu0 0
        %1393 = vmatprep.subr.bf16.mxu0 0
        %1394 = vmatpush1.bf16.msra.mxu0 0
        %1395 = vmatprep.subr.bf16.mxu0 0
        %1396 = vmatpush1.bf16.msra.mxu0 0
        %1397 = vmatprep.subr.bf16.mxu0 0
        %1398 = vmatpush1.bf16.msra.mxu0 0
        %1399 = vmatprep.subr.bf16.mxu0 0
        %1400 = vmatpush1.bf16.msra.mxu0 0
        %1401 = vmatprep.subr.bf16.mxu0 0
        %1402 = vmatpush1.bf16.msra.mxu0 0
        %1403 = vmatprep.subr.bf16.mxu0 0
        %1404 = vmatpush1.bf16.msra.mxu0 0
        %1405 = vmatprep.subr.bf16.mxu0 0
        %1406 = vmatpush1.bf16.msra.mxu0 0
        %1407 = vmatprep.subr.bf16.mxu0 0
        %1408 = vmatpush1.bf16.msra.mxu0 0
        %1409 = vmatprep.subr.bf16.mxu0 0
        %1410 = vmatpush1.bf16.msra.mxu0 0
        %1411 = vmatprep.subr.bf16.mxu0 0
        %1412 = vmatpush1.bf16.msra.mxu0 0
        %1413 = vmatprep.mubr.bf16.mxu0 0
        %1414 = vmatmul.mubr.bf16.gmra.mrb[0].mxu0 %v1336
        %v1415 = vpop.f32.mrb[0].mxu0
        %v1416 = vadd.f32 %v1373, %v1415
        %v1417 = vpop.f32.mrb[0].mxu0
        %v1418 = vadd.f32 %v1375, %v1417
        %v1419 = vpop.f32.mrb[0].mxu0
        %v1420 = vadd.f32 %v1377, %v1419
        %v1421 = vpop.f32.mrb[0].mxu0
        %v1422 = vadd.f32 %v1379, %v1421
        %1423 = vdwg.mxu0
        %s1424 = scalar_lea.vmem [#allocation8], 576
        %v1425 = vld [vmem:[%s1424] sm:$0xff]
        %v1426 = vld [vmem:[%s1424 + $0x8] sm:$0xff]
        %v1427 = vld [vmem:[%s1424 + $0x10] sm:$0xff]
        %v1428 = vld [vmem:[%s1424 + $0x18] sm:$0xff]
        %v1429 = vld [vmem:[%s1424 + $0x20] sm:$0xff]
        %v1430 = vld [vmem:[%s1424 + $0x28] sm:$0xff]
        %v1431 = vld [vmem:[%s1424 + $0x30] sm:$0xff]
        %v1432 = vld [vmem:[%s1424 + $0x38] sm:$0xff]
        %v1433 = vld [vmem:[%s1424 + $0x40] sm:$0xff]
        %v1434 = vld [vmem:[%s1424 + $0x48] sm:$0xff]
        %v1435 = vld [vmem:[%s1424 + $0x50] sm:$0xff]
        %v1436 = vld [vmem:[%s1424 + $0x58] sm:$0xff]
        %v1437 = vld [vmem:[%s1424 + $0x60] sm:$0xff]
        %v1438 = vld [vmem:[%s1424 + $0x68] sm:$0xff]
        %v1439 = vld [vmem:[%s1424 + $0x70] sm:$0xff]
        %v1440 = vld [vmem:[%s1424 + $0x78] sm:$0xff]
        %v1441 = vld [vmem:[%s1424 + $0x80] sm:$0xff]
        %v1442 = vld [vmem:[%s1424 + $0x88] sm:$0xff]
        %v1443 = vld [vmem:[%s1424 + $0x90] sm:$0xff]
        %v1444 = vld [vmem:[%s1424 + $0x98] sm:$0xff]
        %v1445 = vld [vmem:[%s1424 + $0xa0] sm:$0xff]
        %v1446 = vld [vmem:[%s1424 + $0xa8] sm:$0xff]
        %v1447 = vld [vmem:[%s1424 + $0xb0] sm:$0xff]
        %v1448 = vld [vmem:[%s1424 + $0xb8] sm:$0xff]
        %v1449 = vld [vmem:[%s1424 + $0xc0] sm:$0xff]
        %v1450 = vld [vmem:[%s1424 + $0xc8] sm:$0xff]
        %v1451 = vld [vmem:[%s1424 + $0xd0] sm:$0xff]
        %v1452 = vld [vmem:[%s1424 + $0xd8] sm:$0xff]
        %v1453 = vld [vmem:[%s1424 + $0xe0] sm:$0xff]
        %v1454 = vld [vmem:[%s1424 + $0xe8] sm:$0xff]
        %v1455 = vld [vmem:[%s1424 + $0xf0] sm:$0xff]
        %v1456 = vld [vmem:[%s1424 + $0xf8] sm:$0xff]
        %v1457 = vld [vmem:[%s1424 + $0x100] sm:$0xff]
        %v1458 = vld [vmem:[%s1424 + $0x108] sm:$0xff]
        %v1459 = vld [vmem:[%s1424 + $0x110] sm:$0xff]
        %v1460 = vld [vmem:[%s1424 + $0x118] sm:$0xff]
        %vm1467 = vcmask 1046528
        %v1468 = vrot.slane %v768, 1
        %v1469 = vrot.slane %v771, 1
        %v1470 = vsel %vm1467, %v1468, %v1469
        %v1471 = vrot.slane %v769, 1
        %v1472 = vrot.slane %v772, 1
        %v1473 = vsel %vm1467, %v1471, %v1472
        %v1474 = vrot.slane %v770, 1
        %v1475 = vrot.slane %v773, 1
        %v1476 = vsel %vm1467, %v1474, %v1475
        %v1515 = vunpack.c.l.b16 %v1425
        %v1516 = vunpack.c.h.b16 %v1425
        %v1517 = vunpack.c.l.b16 %v1426
        %v1518 = vunpack.c.h.b16 %v1426
        %v1519 = vunpack.c.l.b16 %v1427
        %v1520 = vunpack.c.h.b16 %v1427
        %v1521 = vunpack.c.l.b16 %v1428
        %v1522 = vunpack.c.h.b16 %v1428
        %v1523 = vunpack.c.l.b16 %v1429
        %v1524 = vunpack.c.h.b16 %v1429
        %v1525 = vunpack.c.l.b16 %v1430
        %v1526 = vunpack.c.h.b16 %v1430
        %v1527 = vunpack.c.l.b16 %v1431
        %v1528 = vunpack.c.h.b16 %v1431
        %v1529 = vunpack.c.l.b16 %v1432
        %v1530 = vunpack.c.h.b16 %v1432
        %v1531 = vunpack.c.l.b16 %v1433
        %v1532 = vunpack.c.h.b16 %v1433
        %v1533 = vunpack.c.l.b16 %v1434
        %v1534 = vunpack.c.h.b16 %v1434
        %v1535 = vunpack.c.l.b16 %v1435
        %v1536 = vunpack.c.h.b16 %v1435
        %v1537 = vunpack.c.l.b16 %v1436
        %v1538 = vunpack.c.h.b16 %v1436
        %v1539 = vunpack.c.l.b16 %v1437
        %v1540 = vunpack.c.h.b16 %v1437
        %v1541 = vunpack.c.l.b16 %v1438
        %v1542 = vunpack.c.h.b16 %v1438
        %v1543 = vunpack.c.l.b16 %v1439
        %v1544 = vunpack.c.h.b16 %v1439
        %v1545 = vunpack.c.l.b16 %v1440
        %v1546 = vunpack.c.h.b16 %v1440
        %v1547 = vunpack.c.l.b16 %v1441
        %v1548 = vunpack.c.h.b16 %v1441
        %v1549 = vunpack.c.l.b16 %v1442
        %v1550 = vunpack.c.h.b16 %v1442
        %v1551 = vunpack.c.l.b16 %v1443
        %v1552 = vunpack.c.h.b16 %v1443
        %v1553 = vunpack.c.l.b16 %v1444
        %v1554 = vunpack.c.h.b16 %v1444
        %v1555 = vunpack.c.l.b16 %v1445
        %v1556 = vunpack.c.h.b16 %v1445
        %v1557 = vunpack.c.l.b16 %v1446
        %v1558 = vunpack.c.h.b16 %v1446
        %v1559 = vunpack.c.l.b16 %v1447
        %v1560 = vunpack.c.h.b16 %v1447
        %v1561 = vunpack.c.l.b16 %v1448
        %v1562 = vunpack.c.h.b16 %v1448
        %v1563 = vunpack.c.l.b16 %v1449
        %v1564 = vunpack.c.h.b16 %v1449
        %v1565 = vunpack.c.l.b16 %v1450
        %v1566 = vunpack.c.h.b16 %v1450
        %v1567 = vunpack.c.l.b16 %v1451
        %v1568 = vunpack.c.h.b16 %v1451
        %v1569 = vunpack.c.l.b16 %v1452
        %v1570 = vunpack.c.h.b16 %v1452
        %v1571 = vunpack.c.l.b16 %v1453
        %v1572 = vunpack.c.h.b16 %v1453
        %v1573 = vunpack.c.l.b16 %v1454
        %v1574 = vunpack.c.h.b16 %v1454
        %v1575 = vunpack.c.l.b16 %v1455
        %v1576 = vunpack.c.h.b16 %v1455
        %v1577 = vunpack.c.l.b16 %v1456
        %v1578 = vunpack.c.h.b16 %v1456
        %v1579 = vunpack.c.l.b16 %v1457
        %v1580 = vunpack.c.h.b16 %v1457
        %v1581 = vunpack.c.l.b16 %v1458
        %v1582 = vunpack.c.h.b16 %v1458
        %v1583 = vunpack.c.l.b16 %v1459
        %v1584 = vunpack.c.h.b16 %v1459
        %v1585 = vunpack.c.l.b16 %v1460
        %v1586 = vunpack.c.h.b16 %v1460
        %v1587 = vpack.c.b16 %v1517, %v1515
        %v1588 = vpack.c.b16 %v1518, %v1516
        %v1589 = vpack.c.b16 %v1521, %v1519
        %v1590 = vpack.c.b16 %v1522, %v1520
        %v1591 = vpack.c.b16 %v1525, %v1523
        %v1592 = vpack.c.b16 %v1526, %v1524
        %v1593 = vpack.c.b16 %v1529, %v1527
        %v1594 = vpack.c.b16 %v1530, %v1528
        %v1595 = vpack.c.b16 %v1533, %v1531
        %v1596 = vpack.c.b16 %v1534, %v1532
        %v1597 = vpack.c.b16 %v1537, %v1535
        %v1598 = vpack.c.b16 %v1538, %v1536
        %v1599 = vpack.c.b16 %v1541, %v1539
        %v1600 = vpack.c.b16 %v1542, %v1540
        %v1601 = vpack.c.b16 %v1545, %v1543
        %v1602 = vpack.c.b16 %v1546, %v1544
        %v1603 = vpack.c.b16 %v1549, %v1547
        %v1604 = vpack.c.b16 %v1550, %v1548
        %v1605 = vpack.c.b16 %v1553, %v1551
        %v1606 = vpack.c.b16 %v1554, %v1552
        %v1607 = vpack.c.b16 %v1557, %v1555
        %v1608 = vpack.c.b16 %v1558, %v1556
        %v1609 = vpack.c.b16 %v1561, %v1559
        %v1610 = vpack.c.b16 %v1562, %v1560
        %v1611 = vpack.c.b16 %v1565, %v1563
        %v1612 = vpack.c.b16 %v1566, %v1564
        %v1613 = vpack.c.b16 %v1569, %v1567
        %v1614 = vpack.c.b16 %v1570, %v1568
        %v1615 = vpack.c.b16 %v1573, %v1571
        %v1616 = vpack.c.b16 %v1574, %v1572
        %v1617 = vpack.c.b16 %v1577, %v1575
        %v1618 = vpack.c.b16 %v1578, %v1576
        %v1619 = vpack.c.b16 %v1581, %v1579
        %v1620 = vpack.c.b16 %v1582, %v1580
        %v1621 = vpack.c.b16 %v1585, %v1583
        %v1622 = vpack.c.b16 %v1586, %v1584
        %v1660 = vsel %vm351, %v1476, 0
        %1662 = vmatprep.subr.bf16.mxu0 %v1588
        %1663 = vmatpush1.bf16.msra.mxu0 %v1587
        %1664 = vmatprep.subr.bf16.mxu0 %v1590
        %1665 = vmatpush1.bf16.msra.mxu0 %v1589
        %1666 = vmatprep.subr.bf16.mxu0 %v1592
        %1667 = vmatpush1.bf16.msra.mxu0 %v1591
        %1668 = vmatprep.subr.bf16.mxu0 %v1594
        %1669 = vmatpush1.bf16.msra.mxu0 %v1593
        %1670 = vmatprep.subr.bf16.mxu0 %v1596
        %1671 = vmatpush1.bf16.msra.mxu0 %v1595
        %1672 = vmatprep.subr.bf16.mxu0 %v1598
        %1673 = vmatpush1.bf16.msra.mxu0 %v1597
        %1674 = vmatprep.subr.bf16.mxu0 %v1600
        %1675 = vmatpush1.bf16.msra.mxu0 %v1599
        %1676 = vmatprep.subr.bf16.mxu0 %v1602
        %1677 = vmatpush1.bf16.msra.mxu0 %v1601
        %1678 = vmatprep.subr.bf16.mxu0 %v1604
        %1679 = vmatpush1.bf16.msra.mxu0 %v1603
        %1680 = vmatprep.subr.bf16.mxu0 %v1606
        %1681 = vmatpush1.bf16.msra.mxu0 %v1605
        %1682 = vmatprep.subr.bf16.mxu0 %v1608
        %1683 = vmatpush1.bf16.msra.mxu0 %v1607
        %1684 = vmatprep.subr.bf16.mxu0 %v1610
        %1685 = vmatpush1.bf16.msra.mxu0 %v1609
        %1686 = vmatprep.subr.bf16.mxu0 %v1612
        %1687 = vmatpush1.bf16.msra.mxu0 %v1611
        %1688 = vmatprep.subr.bf16.mxu0 %v1614
        %1689 = vmatpush1.bf16.msra.mxu0 %v1613
        %1690 = vmatprep.subr.bf16.mxu0 %v1616
        %1691 = vmatpush1.bf16.msra.mxu0 %v1615
        %1692 = vmatprep.subr.bf16.mxu0 %v1618
        %1693 = vmatpush1.bf16.msra.mxu0 %v1617
        %1694 = vmatprep.mubr.bf16.mxu0 %v1473
        %1695 = vmatmul.mubr.bf16.gmra.mrb[0].mxu0 %v1470
        %v1696 = vpop.f32.mrb[0].mxu0
        %v1697 = vadd.f32 0.0, %v1696
        %v1698 = vpop.f32.mrb[0].mxu0
        %v1699 = vadd.f32 0.0, %v1698
        %v1700 = vpop.f32.mrb[0].mxu0
        %v1701 = vadd.f32 0.0, %v1700
        %v1702 = vpop.f32.mrb[0].mxu0
        %v1703 = vadd.f32 0.0, %v1702
        %1704 = vdwg.mxu0
        %1705 = vmatprep.subr.bf16.mxu0 %v1620
        %1706 = vmatpush1.bf16.msra.mxu0 %v1619
        %1707 = vmatprep.subr.bf16.mxu0 %v1622
        %1708 = vmatpush1.bf16.msra.mxu0 %v1621
        %1709 = vmatprep.subr.bf16.mxu0 0
        %1710 = vmatpush1.bf16.msra.mxu0 0
        %1711 = vmatprep.subr.bf16.mxu0 0
        %1712 = vmatpush1.bf16.msra.mxu0 0
        %1713 = vmatprep.subr.bf16.mxu0 0
        %1714 = vmatpush1.bf16.msra.mxu0 0
        %1715 = vmatprep.subr.bf16.mxu0 0
        %1716 = vmatpush1.bf16.msra.mxu0 0
        %1717 = vmatprep.subr.bf16.mxu0 0
        %1718 = vmatpush1.bf16.msra.mxu0 0
        %1719 = vmatprep.subr.bf16.mxu0 0
        %1720 = vmatpush1.bf16.msra.mxu0 0
        %1721 = vmatprep.subr.bf16.mxu0 0
        %1722 = vmatpush1.bf16.msra.mxu0 0
        %1723 = vmatprep.subr.bf16.mxu0 0
        %1724 = vmatpush1.bf16.msra.mxu0 0
        %1725 = vmatprep.subr.bf16.mxu0 0
        %1726 = vmatpush1.bf16.msra.mxu0 0
        %1727 = vmatprep.subr.bf16.mxu0 0
        %1728 = vmatpush1.bf16.msra.mxu0 0
        %1729 = vmatprep.subr.bf16.mxu0 0
        %1730 = vmatpush1.bf16.msra.mxu0 0
        %1731 = vmatprep.subr.bf16.mxu0 0
        %1732 = vmatpush1.bf16.msra.mxu0 0
        %1733 = vmatprep.subr.bf16.mxu0 0
        %1734 = vmatpush1.bf16.msra.mxu0 0
        %1735 = vmatprep.subr.bf16.mxu0 0
        %1736 = vmatpush1.bf16.msra.mxu0 0
        %1737 = vmatprep.mubr.bf16.mxu0 0
        %1738 = vmatmul.mubr.bf16.gmra.mrb[0].mxu0 %v1660
        %v1739 = vpop.f32.mrb[0].mxu0
        %v1740 = vadd.f32 %v1697, %v1739
        %v1741 = vpop.f32.mrb[0].mxu0
        %v1742 = vadd.f32 %v1699, %v1741
        %v1743 = vpop.f32.mrb[0].mxu0
        %v1744 = vadd.f32 %v1701, %v1743
        %v1745 = vpop.f32.mrb[0].mxu0
        %v1746 = vadd.f32 %v1703, %v1745
        %1747 = vdwg.mxu0
        %v1748 = vadd.f32 %v1416, %v1740
        %v1749 = vadd.f32 %v1418, %v1742
        %v1750 = vadd.f32 %v1420, %v1744
        %v1751 = vadd.f32 %v1422, %v1746
        %v1752 = vld [vmem:[%s4] sm:$0x3]
        %v1754 = vlaneseq
        %v1755 = vshrl.u32 %v1754, 7
        %v1756 = vsub.s32 0, %v1755
        %v1757 = vrot.slane %v1752, %v1756
        %v1758 = vlaneseq
        %v1759 = vshrl.u32 %v1758, 7
        %v1760 = vsub.s32 1, %v1759
        %v1761 = vrot.slane %v1752, %v1760
        %v1764 = vadd.f32 %v1748, %v1757
        %v1765 = vadd.f32 %v1749, %v1761
        %v1766 = vadd.f32 %v1750, %v1757
        %v1767 = vadd.f32 %v1751, %v1761
        %v1768 = vmax.f32 %v1764, 0.0
        %v1769 = vmax.f32 %v1765, 0.0
        %v1770 = vmax.f32 %v1766, 0.0
        %v1771 = vmax.f32 %v1767, 0.0
        %v1776 = vrot.slane %v1768, 7
        %v1777 = vrot.slane %v1769, 7
        %v1778 = vrot.slane %v1770, 7
        %v1779 = vsel %vm695, %v1776, %v1778
        %v1780 = vrot.slane %v1771, 7
        %v1781 = vsel %vm695, %v1777, %v1780
        %1782 = vrot.lane.b32.xlu0 %v1776, 16
        %v1783 = vpop.permute.xlu0 %1782
        %1784 = vrot.lane.b32.xlu0 %v1777, 16
        %v1785 = vpop.permute.xlu0 %1784
        %1786 = vrot.lane.b32.xlu0 %v1779, 16
        %v1787 = vpop.permute.xlu0 %1786
        %1788 = vrot.lane.b32.xlu0 %v1781, 16
        %v1789 = vpop.permute.xlu0 %1788
        %1790 = vrot.lane.b32.xlu0 %v1778, 16
        %v1791 = vpop.permute.xlu0 %1790
        %1792 = vrot.lane.b32.xlu0 %v1780, 16
        %v1793 = vpop.permute.xlu0 %1792
        %v1794 = vsel %vm714, %v1783, %v1785
        %v1795 = vsel %vm714, %v1787, %v1789
        %v1796 = vsel %vm714, %v1791, %v1793
        %1806 = vst.msk [vmem:[#allocation3] sm:$0xfe] %vm727, %v1783
        %1807 = vst [vmem:[#allocation3 + $0x8] sm:$0xfe] %v1794
        %1808 = vst.msk [vmem:[#allocation3 + $0x10] sm:$0xfe] %vm730, %v1785
        %1809 = vst.msk [vmem:[#allocation3 + $0x18] sm:$0xff] %vm732, %v1787
        %1810 = vst [vmem:[#allocation3 + $0x20] sm:$0xff] %v1795
        %1811 = vst.msk [vmem:[#allocation3 + $0x28] sm:$0xff] %vm714, %v1789
        %1812 = vst.msk [vmem:[#allocation3 + $0x30] sm:$0x1] %vm736, %v1791
        %1813 = vst [vmem:[#allocation3 + $0x38] sm:$0x1] %v1796
        %1814 = vst.msk [vmem:[#allocation3 + $0x40] sm:$0x1] %vm739, %v1793
        %v1815 = vld [vmem:[#allocation3] ss:$8 sm:$0x7]
        %s1816 = scalar_lea.vmem [#allocation3], 2
        %v1817 = vld [vmem:[%s1816] ss:$8 sm:$0x7]
        %s1818 = scalar_lea.vmem [#allocation3], 4
        %v1819 = vld [vmem:[%s1818] ss:$8 sm:$0x7]
        %s1820 = scalar_lea.vmem [#allocation3], 6
        %v1821 = vld [vmem:[%s1820] ss:$8 sm:$0x7]
        %s1822 = scalar_lea.vmem [#allocation3], 24
        %v1823 = vld [vmem:[%s1822] ss:$8 sm:$0x7]
        %s1824 = scalar_lea.vmem [#allocation3], 26
        %v1825 = vld [vmem:[%s1824] ss:$8 sm:$0x7]
        %s1826 = scalar_lea.vmem [#allocation3], 28
        %v1827 = vld [vmem:[%s1826] ss:$8 sm:$0x7]
        %s1828 = scalar_lea.vmem [#allocation3], 30
        %v1829 = vld [vmem:[%s1828] ss:$8 sm:$0x7]
        %s1830 = scalar_lea.vmem [#allocation3], 48
        %v1831 = vld [vmem:[%s1830] ss:$8 sm:$0x7]
        %v1833 = vlaneseq
        %v1834 = vshrl.u32 %v1833, 7
        %v1835 = vsub.s32 0, %v1834
        %v1836 = vrot.slane %v1815, %v1835
        %v1837 = vlaneseq
        %v1838 = vshrl.u32 %v1837, 7
        %v1839 = vsub.s32 1, %v1838
        %v1840 = vrot.slane %v1815, %v1839
        %v1841 = vlaneseq
        %v1842 = vshrl.u32 %v1841, 7
        %v1843 = vsub.s32 2, %v1842
        %v1844 = vrot.slane %v1815, %v1843
        %v1849 = vlaneseq
        %v1850 = vshrl.u32 %v1849, 7
        %v1851 = vsub.s32 0, %v1850
        %v1852 = vrot.slane %v1817, %v1851
        %v1853 = vlaneseq
        %v1854 = vshrl.u32 %v1853, 7
        %v1855 = vsub.s32 1, %v1854
        %v1856 = vrot.slane %v1817, %v1855
        %v1857 = vlaneseq
        %v1858 = vshrl.u32 %v1857, 7
        %v1859 = vsub.s32 2, %v1858
        %v1860 = vrot.slane %v1817, %v1859
        %v1865 = vlaneseq
        %v1866 = vshrl.u32 %v1865, 7
        %v1867 = vsub.s32 0, %v1866
        %v1868 = vrot.slane %v1819, %v1867
        %v1869 = vlaneseq
        %v1870 = vshrl.u32 %v1869, 7
        %v1871 = vsub.s32 1, %v1870
        %v1872 = vrot.slane %v1819, %v1871
        %v1873 = vlaneseq
        %v1874 = vshrl.u32 %v1873, 7
        %v1875 = vsub.s32 2, %v1874
        %v1876 = vrot.slane %v1819, %v1875
        %v1881 = vlaneseq
        %v1882 = vshrl.u32 %v1881, 7
        %v1883 = vsub.s32 0, %v1882
        %v1884 = vrot.slane %v1821, %v1883
        %v1885 = vlaneseq
        %v1886 = vshrl.u32 %v1885, 7
        %v1887 = vsub.s32 1, %v1886
        %v1888 = vrot.slane %v1821, %v1887
        %v1889 = vlaneseq
        %v1890 = vshrl.u32 %v1889, 7
        %v1891 = vsub.s32 2, %v1890
        %v1892 = vrot.slane %v1821, %v1891
        %v1897 = vlaneseq
        %v1898 = vshrl.u32 %v1897, 7
        %v1899 = vsub.s32 0, %v1898
        %v1900 = vrot.slane %v1823, %v1899
        %v1901 = vlaneseq
        %v1902 = vshrl.u32 %v1901, 7
        %v1903 = vsub.s32 1, %v1902
        %v1904 = vrot.slane %v1823, %v1903
        %v1905 = vlaneseq
        %v1906 = vshrl.u32 %v1905, 7
        %v1907 = vsub.s32 2, %v1906
        %v1908 = vrot.slane %v1823, %v1907
        %v1913 = vlaneseq
        %v1914 = vshrl.u32 %v1913, 7
        %v1915 = vsub.s32 0, %v1914
        %v1916 = vrot.slane %v1825, %v1915
        %v1917 = vlaneseq
        %v1918 = vshrl.u32 %v1917, 7
        %v1919 = vsub.s32 1, %v1918
        %v1920 = vrot.slane %v1825, %v1919
        %v1921 = vlaneseq
        %v1922 = vshrl.u32 %v1921, 7
        %v1923 = vsub.s32 2, %v1922
        %v1924 = vrot.slane %v1825, %v1923
        %v1929 = vlaneseq
        %v1930 = vshrl.u32 %v1929, 7
        %v1931 = vsub.s32 0, %v1930
        %v1932 = vrot.slane %v1827, %v1931
        %v1933 = vlaneseq
        %v1934 = vshrl.u32 %v1933, 7
        %v1935 = vsub.s32 1, %v1934
        %v1936 = vrot.slane %v1827, %v1935
        %v1937 = vlaneseq
        %v1938 = vshrl.u32 %v1937, 7
        %v1939 = vsub.s32 2, %v1938
        %v1940 = vrot.slane %v1827, %v1939
        %v1945 = vlaneseq
        %v1946 = vshrl.u32 %v1945, 7
        %v1947 = vsub.s32 0, %v1946
        %v1948 = vrot.slane %v1829, %v1947
        %v1949 = vlaneseq
        %v1950 = vshrl.u32 %v1949, 7
        %v1951 = vsub.s32 1, %v1950
        %v1952 = vrot.slane %v1829, %v1951
        %v1953 = vlaneseq
        %v1954 = vshrl.u32 %v1953, 7
        %v1955 = vsub.s32 2, %v1954
        %v1956 = vrot.slane %v1829, %v1955
        %v1961 = vlaneseq
        %v1962 = vshrl.u32 %v1961, 7
        %v1963 = vsub.s32 0, %v1962
        %v1964 = vrot.slane %v1831, %v1963
        %v1965 = vlaneseq
        %v1966 = vshrl.u32 %v1965, 7
        %v1967 = vsub.s32 1, %v1966
        %v1968 = vrot.slane %v1831, %v1967
        %v1969 = vlaneseq
        %v1970 = vshrl.u32 %v1969, 7
        %v1971 = vsub.s32 2, %v1970
        %v1972 = vrot.slane %v1831, %v1971
        %v1976 = vsel %vm695, %v1836, %v1852
        %v1977 = vsel %vm695, %v1840, %v1856
        %v1978 = vsel %vm695, %v1844, %v1860
        %v1979 = vsel %vm398, %v1976, %v1868
        %v1980 = vsel %vm398, %v1977, %v1872
        %v1981 = vsel %vm398, %v1978, %v1876
        %vm1982 = vcmask 1042432
        %v1983 = vsel %vm1982, %v1979, %v1884
        %v1984 = vsel %vm1982, %v1980, %v1888
        %v1985 = vsel %vm1982, %v1981, %v1892
        %vm1986 = vcmask 1043456
        %v1987 = vsel %vm1986, %v1983, %v1900
        %v1988 = vsel %vm1986, %v1984, %v1904
        %v1989 = vsel %vm1986, %v1985, %v1908
        %vm1990 = vcmask 1044480
        %v1991 = vsel %vm1990, %v1987, %v1916
        %v1992 = vsel %vm1990, %v1988, %v1920
        %v1993 = vsel %vm1990, %v1989, %v1924
        %vm1994 = vcmask 1045504
        %v1995 = vsel %vm1994, %v1991, %v1932
        %v1996 = vsel %vm1994, %v1992, %v1936
        %v1997 = vsel %vm1994, %v1993, %v1940
        %vm1998 = vcmask 1046528
        %v1999 = vsel %vm1998, %v1995, %v1948
        %v2000 = vsel %vm1998, %v1996, %v1952
        %v2001 = vsel %vm1998, %v1997, %v1956
        %s2002 = scalar_lea.vmem [#allocation3], 1
        %v2003 = vld [vmem:[%s2002] ss:$8 sm:$0x7]
        %s2004 = scalar_lea.vmem [#allocation3], 3
        %v2005 = vld [vmem:[%s2004] ss:$8 sm:$0x7]
        %s2006 = scalar_lea.vmem [#allocation3], 5
        %v2007 = vld [vmem:[%s2006] ss:$8 sm:$0x7]
        %s2008 = scalar_lea.vmem [#allocation3], 7
        %v2009 = vld [vmem:[%s2008] ss:$8 sm:$0x7]
        %s2010 = scalar_lea.vmem [#allocation3], 25
        %v2011 = vld [vmem:[%s2010] ss:$8 sm:$0x7]
        %s2012 = scalar_lea.vmem [#allocation3], 27
        %v2013 = vld [vmem:[%s2012] ss:$8 sm:$0x7]
        %s2014 = scalar_lea.vmem [#allocation3], 29
        %v2015 = vld [vmem:[%s2014] ss:$8 sm:$0x7]
        %s2016 = scalar_lea.vmem [#allocation3], 31
        %v2017 = vld [vmem:[%s2016] ss:$8 sm:$0x7]
        %v2019 = vlaneseq
        %v2020 = vshrl.u32 %v2019, 7
        %v2021 = vsub.s32 0, %v2020
        %v2022 = vrot.slane %v2003, %v2021
        %v2023 = vlaneseq
        %v2024 = vshrl.u32 %v2023, 7
        %v2025 = vsub.s32 1, %v2024
        %v2026 = vrot.slane %v2003, %v2025
        %v2027 = vlaneseq
        %v2028 = vshrl.u32 %v2027, 7
        %v2029 = vsub.s32 2, %v2028
        %v2030 = vrot.slane %v2003, %v2029
        %v2035 = vlaneseq
        %v2036 = vshrl.u32 %v2035, 7
        %v2037 = vsub.s32 0, %v2036
        %v2038 = vrot.slane %v2005, %v2037
        %v2039 = vlaneseq
        %v2040 = vshrl.u32 %v2039, 7
        %v2041 = vsub.s32 1, %v2040
        %v2042 = vrot.slane %v2005, %v2041
        %v2043 = vlaneseq
        %v2044 = vshrl.u32 %v2043, 7
        %v2045 = vsub.s32 2, %v2044
        %v2046 = vrot.slane %v2005, %v2045
        %v2051 = vlaneseq
        %v2052 = vshrl.u32 %v2051, 7
        %v2053 = vsub.s32 0, %v2052
        %v2054 = vrot.slane %v2007, %v2053
        %v2055 = vlaneseq
        %v2056 = vshrl.u32 %v2055, 7
        %v2057 = vsub.s32 1, %v2056
        %v2058 = vrot.slane %v2007, %v2057
        %v2059 = vlaneseq
        %v2060 = vshrl.u32 %v2059, 7
        %v2061 = vsub.s32 2, %v2060
        %v2062 = vrot.slane %v2007, %v2061
        %v2067 = vlaneseq
        %v2068 = vshrl.u32 %v2067, 7
        %v2069 = vsub.s32 0, %v2068
        %v2070 = vrot.slane %v2009, %v2069
        %v2071 = vlaneseq
        %v2072 = vshrl.u32 %v2071, 7
        %v2073 = vsub.s32 1, %v2072
        %v2074 = vrot.slane %v2009, %v2073
        %v2075 = vlaneseq
        %v2076 = vshrl.u32 %v2075, 7
        %v2077 = vsub.s32 2, %v2076
        %v2078 = vrot.slane %v2009, %v2077
        %v2083 = vlaneseq
        %v2084 = vshrl.u32 %v2083, 7
        %v2085 = vsub.s32 0, %v2084
        %v2086 = vrot.slane %v2011, %v2085
        %v2087 = vlaneseq
        %v2088 = vshrl.u32 %v2087, 7
        %v2089 = vsub.s32 1, %v2088
        %v2090 = vrot.slane %v2011, %v2089
        %v2091 = vlaneseq
        %v2092 = vshrl.u32 %v2091, 7
        %v2093 = vsub.s32 2, %v2092
        %v2094 = vrot.slane %v2011, %v2093
        %v2099 = vlaneseq
        %v2100 = vshrl.u32 %v2099, 7
        %v2101 = vsub.s32 0, %v2100
        %v2102 = vrot.slane %v2013, %v2101
        %v2103 = vlaneseq
        %v2104 = vshrl.u32 %v2103, 7
        %v2105 = vsub.s32 1, %v2104
        %v2106 = vrot.slane %v2013, %v2105
        %v2107 = vlaneseq
        %v2108 = vshrl.u32 %v2107, 7
        %v2109 = vsub.s32 2, %v2108
        %v2110 = vrot.slane %v2013, %v2109
        %v2115 = vlaneseq
        %v2116 = vshrl.u32 %v2115, 7
        %v2117 = vsub.s32 0, %v2116
        %v2118 = vrot.slane %v2015, %v2117
        %v2119 = vlaneseq
        %v2120 = vshrl.u32 %v2119, 7
        %v2121 = vsub.s32 1, %v2120
        %v2122 = vrot.slane %v2015, %v2121
        %v2123 = vlaneseq
        %v2124 = vshrl.u32 %v2123, 7
        %v2125 = vsub.s32 2, %v2124
        %v2126 = vrot.slane %v2015, %v2125
        %v2131 = vlaneseq
        %v2132 = vshrl.u32 %v2131, 7
        %v2133 = vsub.s32 0, %v2132
        %v2134 = vrot.slane %v2017, %v2133
        %v2135 = vlaneseq
        %v2136 = vshrl.u32 %v2135, 7
        %v2137 = vsub.s32 1, %v2136
        %v2138 = vrot.slane %v2017, %v2137
        %v2139 = vlaneseq
        %v2140 = vshrl.u32 %v2139, 7
        %v2141 = vsub.s32 2, %v2140
        %v2142 = vrot.slane %v2017, %v2141
        %v2146 = vsel %vm695, %v2022, %v2038
        %v2147 = vsel %vm695, %v2026, %v2042
        %v2148 = vsel %vm695, %v2030, %v2046
        %v2149 = vsel %vm398, %v2146, %v2054
        %v2150 = vsel %vm398, %v2147, %v2058
        %v2151 = vsel %vm398, %v2148, %v2062
        %v2152 = vsel %vm1982, %v2149, %v2070
        %v2153 = vsel %vm1982, %v2150, %v2074
        %v2154 = vsel %vm1982, %v2151, %v2078
        %v2155 = vsel %vm1986, %v2152, %v2086
        %v2156 = vsel %vm1986, %v2153, %v2090
        %v2157 = vsel %vm1986, %v2154, %v2094
        %v2158 = vsel %vm1990, %v2155, %v2102
        %v2159 = vsel %vm1990, %v2156, %v2106
        %v2160 = vsel %vm1990, %v2157, %v2110
        %v2161 = vsel %vm1994, %v2158, %v2118
        %v2162 = vsel %vm1994, %v2159, %v2122
        %v2163 = vsel %vm1994, %v2160, %v2126
        %v2164 = vsel %vm1998, %v2161, %v2134
        %v2165 = vsel %vm1998, %v2162, %v2138
        %v2166 = vsel %vm1998, %v2163, %v2142
        %v2167 = vpack.c.bf16 %v1999, %v1999
        %v2168 = vpack.c.bf16 %v2000, %v2000
        %v2169 = vpack.c.bf16 %v2001, %v2001
        %v2170 = vpack.c.bf16 %v2164, %v2164
        %v2171 = vpack.c.bf16 %v2165, %v2165
        %v2172 = vpack.c.bf16 %v2166, %v2166
        %v2173 = vpack.c.bf16 %v1964, %v1999
        %v2174 = vpack.c.bf16 %v1968, %v2000
        %v2175 = vpack.c.bf16 %v1972, %v2001
        %v2176 = vld [vmem:[#allocation9] sm:$0xff]
        %v2177 = vld [vmem:[#allocation9 + $0x8] sm:$0xff]
        %v2178 = vld [vmem:[#allocation9 + $0x10] sm:$0xff]
        %v2179 = vld [vmem:[#allocation9 + $0x18] sm:$0xff]
        %v2180 = vld [vmem:[#allocation9 + $0x20] sm:$0xff]
        %v2181 = vld [vmem:[#allocation9 + $0x28] sm:$0xff]
        %v2182 = vld [vmem:[#allocation9 + $0x30] sm:$0xff]
        %v2183 = vld [vmem:[#allocation9 + $0x38] sm:$0xff]
        %v2184 = vld [vmem:[#allocation9 + $0x40] sm:$0xff]
        %v2185 = vld [vmem:[#allocation9 + $0x48] sm:$0xff]
        %v2186 = vld [vmem:[#allocation9 + $0x50] sm:$0xff]
        %v2187 = vld [vmem:[#allocation9 + $0x58] sm:$0xff]
        %v2188 = vld [vmem:[#allocation9 + $0x60] sm:$0xff]
        %v2189 = vld [vmem:[#allocation9 + $0x68] sm:$0xff]
        %v2190 = vld [vmem:[#allocation9 + $0x70] sm:$0xff]
        %v2191 = vld [vmem:[#allocation9 + $0x78] sm:$0xff]
        %v2192 = vld [vmem:[#allocation9 + $0x80] sm:$0xff]
        %v2193 = vld [vmem:[#allocation9 + $0x88] sm:$0xff]
        %v2194 = vld [vmem:[#allocation9 + $0x90] sm:$0xff]
        %v2195 = vld [vmem:[#allocation9 + $0x98] sm:$0xff]
        %v2196 = vld [vmem:[#allocation9 + $0xa0] sm:$0xff]
        %v2197 = vld [vmem:[#allocation9 + $0xa8] sm:$0xff]
        %v2198 = vld [vmem:[#allocation9 + $0xb0] sm:$0xff]
        %v2199 = vld [vmem:[#allocation9 + $0xb8] sm:$0xff]
        %v2200 = vld [vmem:[#allocation9 + $0xc0] sm:$0xff]
        %v2201 = vld [vmem:[#allocation9 + $0xc8] sm:$0xff]
        %v2202 = vld [vmem:[#allocation9 + $0xd0] sm:$0xff]
        %v2203 = vld [vmem:[#allocation9 + $0xd8] sm:$0xff]
        %v2204 = vld [vmem:[#allocation9 + $0xe0] sm:$0xff]
        %v2205 = vld [vmem:[#allocation9 + $0xe8] sm:$0xff]
        %v2206 = vld [vmem:[#allocation9 + $0xf0] sm:$0xff]
        %v2207 = vld [vmem:[#allocation9 + $0xf8] sm:$0xff]
        %v2208 = vld [vmem:[#allocation9 + $0x100] sm:$0xff]
        %v2209 = vld [vmem:[#allocation9 + $0x108] sm:$0xff]
        %v2210 = vld [vmem:[#allocation9 + $0x110] sm:$0xff]
        %v2211 = vld [vmem:[#allocation9 + $0x118] sm:$0xff]
        %s2212 = scalar_lea.vmem [#allocation9], 288
        %v2213 = vld [vmem:[%s2212] sm:$0xff]
        %v2214 = vld [vmem:[%s2212 + $0x8] sm:$0xff]
        %v2215 = vld [vmem:[%s2212 + $0x10] sm:$0xff]
        %v2216 = vld [vmem:[%s2212 + $0x18] sm:$0xff]
        %v2217 = vld [vmem:[%s2212 + $0x20] sm:$0xff]
        %v2218 = vld [vmem:[%s2212 + $0x28] sm:$0xff]
        %v2219 = vld [vmem:[%s2212 + $0x30] sm:$0xff]
        %v2220 = vld [vmem:[%s2212 + $0x38] sm:$0xff]
        %v2221 = vld [vmem:[%s2212 + $0x40] sm:$0xff]
        %v2222 = vld [vmem:[%s2212 + $0x48] sm:$0xff]
        %v2223 = vld [vmem:[%s2212 + $0x50] sm:$0xff]
        %v2224 = vld [vmem:[%s2212 + $0x58] sm:$0xff]
        %v2225 = vld [vmem:[%s2212 + $0x60] sm:$0xff]
        %v2226 = vld [vmem:[%s2212 + $0x68] sm:$0xff]
        %v2227 = vld [vmem:[%s2212 + $0x70] sm:$0xff]
        %v2228 = vld [vmem:[%s2212 + $0x78] sm:$0xff]
        %v2229 = vld [vmem:[%s2212 + $0x80] sm:$0xff]
        %v2230 = vld [vmem:[%s2212 + $0x88] sm:$0xff]
        %v2231 = vld [vmem:[%s2212 + $0x90] sm:$0xff]
        %v2232 = vld [vmem:[%s2212 + $0x98] sm:$0xff]
        %v2233 = vld [vmem:[%s2212 + $0xa0] sm:$0xff]
        %v2234 = vld [vmem:[%s2212 + $0xa8] sm:$0xff]
        %v2235 = vld [vmem:[%s2212 + $0xb0] sm:$0xff]
        %v2236 = vld [vmem:[%s2212 + $0xb8] sm:$0xff]
        %v2237 = vld [vmem:[%s2212 + $0xc0] sm:$0xff]
        %v2238 = vld [vmem:[%s2212 + $0xc8] sm:$0xff]
        %v2239 = vld [vmem:[%s2212 + $0xd0] sm:$0xff]
        %v2240 = vld [vmem:[%s2212 + $0xd8] sm:$0xff]
        %v2241 = vld [vmem:[%s2212 + $0xe0] sm:$0xff]
        %v2242 = vld [vmem:[%s2212 + $0xe8] sm:$0xff]
        %v2243 = vld [vmem:[%s2212 + $0xf0] sm:$0xff]
        %v2244 = vld [vmem:[%s2212 + $0xf8] sm:$0xff]
        %v2245 = vld [vmem:[%s2212 + $0x100] sm:$0xff]
        %v2246 = vld [vmem:[%s2212 + $0x108] sm:$0xff]
        %v2247 = vld [vmem:[%s2212 + $0x110] sm:$0xff]
        %v2248 = vld [vmem:[%s2212 + $0x118] sm:$0xff]
        %v2285 = vunpack.c.l.b16 %v2213
        %v2286 = vunpack.c.h.b16 %v2213
        %v2287 = vunpack.c.l.b16 %v2214
        %v2288 = vunpack.c.h.b16 %v2214
        %v2289 = vunpack.c.l.b16 %v2215
        %v2290 = vunpack.c.h.b16 %v2215
        %v2291 = vunpack.c.l.b16 %v2216
        %v2292 = vunpack.c.h.b16 %v2216
        %v2293 = vunpack.c.l.b16 %v2217
        %v2294 = vunpack.c.h.b16 %v2217
        %v2295 = vunpack.c.l.b16 %v2218
        %v2296 = vunpack.c.h.b16 %v2218
        %v2297 = vunpack.c.l.b16 %v2219
        %v2298 = vunpack.c.h.b16 %v2219
        %v2299 = vunpack.c.l.b16 %v2220
        %v2300 = vunpack.c.h.b16 %v2220
        %v2301 = vunpack.c.l.b16 %v2221
        %v2302 = vunpack.c.h.b16 %v2221
        %v2303 = vunpack.c.l.b16 %v2222
        %v2304 = vunpack.c.h.b16 %v2222
        %v2305 = vunpack.c.l.b16 %v2223
        %v2306 = vunpack.c.h.b16 %v2223
        %v2307 = vunpack.c.l.b16 %v2224
        %v2308 = vunpack.c.h.b16 %v2224
        %v2309 = vunpack.c.l.b16 %v2225
        %v2310 = vunpack.c.h.b16 %v2225
        %v2311 = vunpack.c.l.b16 %v2226
        %v2312 = vunpack.c.h.b16 %v2226
        %v2313 = vunpack.c.l.b16 %v2227
        %v2314 = vunpack.c.h.b16 %v2227
        %v2315 = vunpack.c.l.b16 %v2228
        %v2316 = vunpack.c.h.b16 %v2228
        %v2317 = vunpack.c.l.b16 %v2229
        %v2318 = vunpack.c.h.b16 %v2229
        %v2319 = vunpack.c.l.b16 %v2230
        %v2320 = vunpack.c.h.b16 %v2230
        %v2321 = vunpack.c.l.b16 %v2231
        %v2322 = vunpack.c.h.b16 %v2231
        %v2323 = vunpack.c.l.b16 %v2232
        %v2324 = vunpack.c.h.b16 %v2232
        %v2325 = vunpack.c.l.b16 %v2233
        %v2326 = vunpack.c.h.b16 %v2233
        %v2327 = vunpack.c.l.b16 %v2234
        %v2328 = vunpack.c.h.b16 %v2234
        %v2329 = vunpack.c.l.b16 %v2235
        %v2330 = vunpack.c.h.b16 %v2235
        %v2331 = vunpack.c.l.b16 %v2236
        %v2332 = vunpack.c.h.b16 %v2236
        %v2333 = vunpack.c.l.b16 %v2237
        %v2334 = vunpack.c.h.b16 %v2237
        %v2335 = vunpack.c.l.b16 %v2238
        %v2336 = vunpack.c.h.b16 %v2238
        %v2337 = vunpack.c.l.b16 %v2239
        %v2338 = vunpack.c.h.b16 %v2239
        %v2339 = vunpack.c.l.b16 %v2240
        %v2340 = vunpack.c.h.b16 %v2240
        %v2341 = vunpack.c.l.b16 %v2241
        %v2342 = vunpack.c.h.b16 %v2241
        %v2343 = vunpack.c.l.b16 %v2242
        %v2344 = vunpack.c.h.b16 %v2242
        %v2345 = vunpack.c.l.b16 %v2243
        %v2346 = vunpack.c.h.b16 %v2243
        %v2347 = vunpack.c.l.b16 %v2244
        %v2348 = vunpack.c.h.b16 %v2244
        %v2349 = vunpack.c.l.b16 %v2245
        %v2350 = vunpack.c.h.b16 %v2245
        %v2351 = vunpack.c.l.b16 %v2246
        %v2352 = vunpack.c.h.b16 %v2246
        %v2353 = vunpack.c.l.b16 %v2247
        %v2354 = vunpack.c.h.b16 %v2247
        %v2355 = vunpack.c.l.b16 %v2248
        %v2356 = vunpack.c.h.b16 %v2248
        %v2357 = vpack.c.b16 %v2287, %v2285
        %v2358 = vpack.c.b16 %v2288, %v2286
        %v2359 = vpack.c.b16 %v2291, %v2289
        %v2360 = vpack.c.b16 %v2292, %v2290
        %v2361 = vpack.c.b16 %v2295, %v2293
        %v2362 = vpack.c.b16 %v2296, %v2294
        %v2363 = vpack.c.b16 %v2299, %v2297
        %v2364 = vpack.c.b16 %v2300, %v2298
        %v2365 = vpack.c.b16 %v2303, %v2301
        %v2366 = vpack.c.b16 %v2304, %v2302
        %v2367 = vpack.c.b16 %v2307, %v2305
        %v2368 = vpack.c.b16 %v2308, %v2306
        %v2369 = vpack.c.b16 %v2311, %v2309
        %v2370 = vpack.c.b16 %v2312, %v2310
        %v2371 = vpack.c.b16 %v2315, %v2313
        %v2372 = vpack.c.b16 %v2316, %v2314
        %v2373 = vpack.c.b16 %v2319, %v2317
        %v2374 = vpack.c.b16 %v2320, %v2318
        %v2375 = vpack.c.b16 %v2323, %v2321
        %v2376 = vpack.c.b16 %v2324, %v2322
        %v2377 = vpack.c.b16 %v2327, %v2325
        %v2378 = vpack.c.b16 %v2328, %v2326
        %v2379 = vpack.c.b16 %v2331, %v2329
        %v2380 = vpack.c.b16 %v2332, %v2330
        %v2381 = vpack.c.b16 %v2335, %v2333
        %v2382 = vpack.c.b16 %v2336, %v2334
        %v2383 = vpack.c.b16 %v2339, %v2337
        %v2384 = vpack.c.b16 %v2340, %v2338
        %v2385 = vpack.c.b16 %v2343, %v2341
        %v2386 = vpack.c.b16 %v2344, %v2342
        %v2387 = vpack.c.b16 %v2347, %v2345
        %v2388 = vpack.c.b16 %v2348, %v2346
        %v2389 = vpack.c.b16 %v2351, %v2349
        %v2390 = vpack.c.b16 %v2352, %v2350
        %v2391 = vpack.c.b16 %v2355, %v2353
        %v2392 = vpack.c.b16 %v2356, %v2354
        %v2430 = vsel %vm351, %v2172, 0
        %2432 = vmatprep.subr.bf16.mxu0 %v2358
        %2433 = vmatpush1.bf16.msra.mxu0 %v2357
        %2434 = vmatprep.subr.bf16.mxu0 %v2360
        %2435 = vmatpush1.bf16.msra.mxu0 %v2359
        %2436 = vmatprep.subr.bf16.mxu0 %v2362
        %2437 = vmatpush1.bf16.msra.mxu0 %v2361
        %2438 = vmatprep.subr.bf16.mxu0 %v2364
        %2439 = vmatpush1.bf16.msra.mxu0 %v2363
        %2440 = vmatprep.subr.bf16.mxu0 %v2366
        %2441 = vmatpush1.bf16.msra.mxu0 %v2365
        %2442 = vmatprep.subr.bf16.mxu0 %v2368
        %2443 = vmatpush1.bf16.msra.mxu0 %v2367
        %2444 = vmatprep.subr.bf16.mxu0 %v2370
        %2445 = vmatpush1.bf16.msra.mxu0 %v2369
        %2446 = vmatprep.subr.bf16.mxu0 %v2372
        %2447 = vmatpush1.bf16.msra.mxu0 %v2371
        %2448 = vmatprep.subr.bf16.mxu0 %v2374
        %2449 = vmatpush1.bf16.msra.mxu0 %v2373
        %2450 = vmatprep.subr.bf16.mxu0 %v2376
        %2451 = vmatpush1.bf16.msra.mxu0 %v2375
        %2452 = vmatprep.subr.bf16.mxu0 %v2378
        %2453 = vmatpush1.bf16.msra.mxu0 %v2377
        %2454 = vmatprep.subr.bf16.mxu0 %v2380
        %2455 = vmatpush1.bf16.msra.mxu0 %v2379
        %2456 = vmatprep.subr.bf16.mxu0 %v2382
        %2457 = vmatpush1.bf16.msra.mxu0 %v2381
        %2458 = vmatprep.subr.bf16.mxu0 %v2384
        %2459 = vmatpush1.bf16.msra.mxu0 %v2383
        %2460 = vmatprep.subr.bf16.mxu0 %v2386
        %2461 = vmatpush1.bf16.msra.mxu0 %v2385
        %2462 = vmatprep.subr.bf16.mxu0 %v2388
        %2463 = vmatpush1.bf16.msra.mxu0 %v2387
        %2464 = vmatprep.mubr.bf16.mxu0 %v2171
        %2465 = vmatmul.mubr.bf16.gmra.mrb[0].mxu0 %v2170
        %v2466 = vpop.f32.mrb[0].mxu0
        %v2467 = vadd.f32 0.0, %v2466
        %v2468 = vpop.f32.mrb[0].mxu0
        %v2469 = vadd.f32 0.0, %v2468
        %v2470 = vpop.f32.mrb[0].mxu0
        %v2471 = vpop.f32.mrb[0].mxu0
        %2472 = vdwg.mxu0
        %2473 = vmatprep.subr.bf16.mxu0 %v2390
        %2474 = vmatpush1.bf16.msra.mxu0 %v2389
        %2475 = vmatprep.subr.bf16.mxu0 %v2392
        %2476 = vmatpush1.bf16.msra.mxu0 %v2391
        %2477 = vmatprep.subr.bf16.mxu0 0
        %2478 = vmatpush1.bf16.msra.mxu0 0
        %2479 = vmatprep.subr.bf16.mxu0 0
        %2480 = vmatpush1.bf16.msra.mxu0 0
        %2481 = vmatprep.subr.bf16.mxu0 0
        %2482 = vmatpush1.bf16.msra.mxu0 0
        %2483 = vmatprep.subr.bf16.mxu0 0
        %2484 = vmatpush1.bf16.msra.mxu0 0
        %2485 = vmatprep.subr.bf16.mxu0 0
        %2486 = vmatpush1.bf16.msra.mxu0 0
        %2487 = vmatprep.subr.bf16.mxu0 0
        %2488 = vmatpush1.bf16.msra.mxu0 0
        %2489 = vmatprep.subr.bf16.mxu0 0
        %2490 = vmatpush1.bf16.msra.mxu0 0
        %2491 = vmatprep.subr.bf16.mxu0 0
        %2492 = vmatpush1.bf16.msra.mxu0 0
        %2493 = vmatprep.subr.bf16.mxu0 0
        %2494 = vmatpush1.bf16.msra.mxu0 0
        %2495 = vmatprep.subr.bf16.mxu0 0
        %2496 = vmatpush1.bf16.msra.mxu0 0
        %2497 = vmatprep.subr.bf16.mxu0 0
        %2498 = vmatpush1.bf16.msra.mxu0 0
        %2499 = vmatprep.subr.bf16.mxu0 0
        %2500 = vmatpush1.bf16.msra.mxu0 0
        %2501 = vmatprep.subr.bf16.mxu0 0
        %2502 = vmatpush1.bf16.msra.mxu0 0
        %2503 = vmatprep.subr.bf16.mxu0 0
        %2504 = vmatpush1.bf16.msra.mxu0 0
        %2505 = vmatprep.mubr.bf16.mxu0 0
        %2506 = vmatmul.mubr.bf16.gmra.mrb[0].mxu0 %v2430
        %v2507 = vpop.f32.mrb[0].mxu0
        %v2508 = vadd.f32 %v2467, %v2507
        %v2509 = vpop.f32.mrb[0].mxu0
        %v2510 = vadd.f32 %v2469, %v2509
        %v2511 = vpop.f32.mrb[0].mxu0
        %v2512 = vpop.f32.mrb[0].mxu0
        %2513 = vdwg.mxu0
        %v2550 = vunpack.c.l.b16 %v2176
        %v2551 = vunpack.c.h.b16 %v2176
        %v2552 = vunpack.c.l.b16 %v2177
        %v2553 = vunpack.c.h.b16 %v2177
        %v2554 = vunpack.c.l.b16 %v2178
        %v2555 = vunpack.c.h.b16 %v2178
        %v2556 = vunpack.c.l.b16 %v2179
        %v2557 = vunpack.c.h.b16 %v2179
        %v2558 = vunpack.c.l.b16 %v2180
        %v2559 = vunpack.c.h.b16 %v2180
        %v2560 = vunpack.c.l.b16 %v2181
        %v2561 = vunpack.c.h.b16 %v2181
        %v2562 = vunpack.c.l.b16 %v2182
        %v2563 = vunpack.c.h.b16 %v2182
        %v2564 = vunpack.c.l.b16 %v2183
        %v2565 = vunpack.c.h.b16 %v2183
        %v2566 = vunpack.c.l.b16 %v2184
        %v2567 = vunpack.c.h.b16 %v2184
        %v2568 = vunpack.c.l.b16 %v2185
        %v2569 = vunpack.c.h.b16 %v2185
        %v2570 = vunpack.c.l.b16 %v2186
        %v2571 = vunpack.c.h.b16 %v2186
        %v2572 = vunpack.c.l.b16 %v2187
        %v2573 = vunpack.c.h.b16 %v2187
        %v2574 = vunpack.c.l.b16 %v2188
        %v2575 = vunpack.c.h.b16 %v2188
        %v2576 = vunpack.c.l.b16 %v2189
        %v2577 = vunpack.c.h.b16 %v2189
        %v2578 = vunpack.c.l.b16 %v2190
        %v2579 = vunpack.c.h.b16 %v2190
        %v2580 = vunpack.c.l.b16 %v2191
        %v2581 = vunpack.c.h.b16 %v2191
        %v2582 = vunpack.c.l.b16 %v2192
        %v2583 = vunpack.c.h.b16 %v2192
        %v2584 = vunpack.c.l.b16 %v2193
        %v2585 = vunpack.c.h.b16 %v2193
        %v2586 = vunpack.c.l.b16 %v2194
        %v2587 = vunpack.c.h.b16 %v2194
        %v2588 = vunpack.c.l.b16 %v2195
        %v2589 = vunpack.c.h.b16 %v2195
        %v2590 = vunpack.c.l.b16 %v2196
        %v2591 = vunpack.c.h.b16 %v2196
        %v2592 = vunpack.c.l.b16 %v2197
        %v2593 = vunpack.c.h.b16 %v2197
        %v2594 = vunpack.c.l.b16 %v2198
        %v2595 = vunpack.c.h.b16 %v2198
        %v2596 = vunpack.c.l.b16 %v2199
        %v2597 = vunpack.c.h.b16 %v2199
        %v2598 = vunpack.c.l.b16 %v2200
        %v2599 = vunpack.c.h.b16 %v2200
        %v2600 = vunpack.c.l.b16 %v2201
        %v2601 = vunpack.c.h.b16 %v2201
        %v2602 = vunpack.c.l.b16 %v2202
        %v2603 = vunpack.c.h.b16 %v2202
        %v2604 = vunpack.c.l.b16 %v2203
        %v2605 = vunpack.c.h.b16 %v2203
        %v2606 = vunpack.c.l.b16 %v2204
        %v2607 = vunpack.c.h.b16 %v2204
        %v2608 = vunpack.c.l.b16 %v2205
        %v2609 = vunpack.c.h.b16 %v2205
        %v2610 = vunpack.c.l.b16 %v2206
        %v2611 = vunpack.c.h.b16 %v2206
        %v2612 = vunpack.c.l.b16 %v2207
        %v2613 = vunpack.c.h.b16 %v2207
        %v2614 = vunpack.c.l.b16 %v2208
        %v2615 = vunpack.c.h.b16 %v2208
        %v2616 = vunpack.c.l.b16 %v2209
        %v2617 = vunpack.c.h.b16 %v2209
        %v2618 = vunpack.c.l.b16 %v2210
        %v2619 = vunpack.c.h.b16 %v2210
        %v2620 = vunpack.c.l.b16 %v2211
        %v2621 = vunpack.c.h.b16 %v2211
        %v2622 = vpack.c.b16 %v2552, %v2550
        %v2623 = vpack.c.b16 %v2553, %v2551
        %v2624 = vpack.c.b16 %v2556, %v2554
        %v2625 = vpack.c.b16 %v2557, %v2555
        %v2626 = vpack.c.b16 %v2560, %v2558
        %v2627 = vpack.c.b16 %v2561, %v2559
        %v2628 = vpack.c.b16 %v2564, %v2562
        %v2629 = vpack.c.b16 %v2565, %v2563
        %v2630 = vpack.c.b16 %v2568, %v2566
        %v2631 = vpack.c.b16 %v2569, %v2567
        %v2632 = vpack.c.b16 %v2572, %v2570
        %v2633 = vpack.c.b16 %v2573, %v2571
        %v2634 = vpack.c.b16 %v2576, %v2574
        %v2635 = vpack.c.b16 %v2577, %v2575
        %v2636 = vpack.c.b16 %v2580, %v2578
        %v2637 = vpack.c.b16 %v2581, %v2579
        %v2638 = vpack.c.b16 %v2584, %v2582
        %v2639 = vpack.c.b16 %v2585, %v2583
        %v2640 = vpack.c.b16 %v2588, %v2586
        %v2641 = vpack.c.b16 %v2589, %v2587
        %v2642 = vpack.c.b16 %v2592, %v2590
        %v2643 = vpack.c.b16 %v2593, %v2591
        %v2644 = vpack.c.b16 %v2596, %v2594
        %v2645 = vpack.c.b16 %v2597, %v2595
        %v2646 = vpack.c.b16 %v2600, %v2598
        %v2647 = vpack.c.b16 %v2601, %v2599
        %v2648 = vpack.c.b16 %v2604, %v2602
        %v2649 = vpack.c.b16 %v2605, %v2603
        %v2650 = vpack.c.b16 %v2608, %v2606
        %v2651 = vpack.c.b16 %v2609, %v2607
        %v2652 = vpack.c.b16 %v2612, %v2610
        %v2653 = vpack.c.b16 %v2613, %v2611
        %v2654 = vpack.c.b16 %v2616, %v2614
        %v2655 = vpack.c.b16 %v2617, %v2615
        %v2656 = vpack.c.b16 %v2620, %v2618
        %v2657 = vpack.c.b16 %v2621, %v2619
        %v2695 = vsel %vm351, %v2169, 0
        %2697 = vmatprep.subr.bf16.mxu0 %v2623
        %2698 = vmatpush1.bf16.msra.mxu0 %v2622
        %2699 = vmatprep.subr.bf16.mxu0 %v2625
        %2700 = vmatpush1.bf16.msra.mxu0 %v2624
        %2701 = vmatprep.subr.bf16.mxu0 %v2627
        %2702 = vmatpush1.bf16.msra.mxu0 %v2626
        %2703 = vmatprep.subr.bf16.mxu0 %v2629
        %2704 = vmatpush1.bf16.msra.mxu0 %v2628
        %2705 = vmatprep.subr.bf16.mxu0 %v2631
        %2706 = vmatpush1.bf16.msra.mxu0 %v2630
        %2707 = vmatprep.subr.bf16.mxu0 %v2633
        %2708 = vmatpush1.bf16.msra.mxu0 %v2632
        %2709 = vmatprep.subr.bf16.mxu0 %v2635
        %2710 = vmatpush1.bf16.msra.mxu0 %v2634
        %2711 = vmatprep.subr.bf16.mxu0 %v2637
        %2712 = vmatpush1.bf16.msra.mxu0 %v2636
        %2713 = vmatprep.subr.bf16.mxu0 %v2639
        %2714 = vmatpush1.bf16.msra.mxu0 %v2638
        %2715 = vmatprep.subr.bf16.mxu0 %v2641
        %2716 = vmatpush1.bf16.msra.mxu0 %v2640
        %2717 = vmatprep.subr.bf16.mxu0 %v2643
        %2718 = vmatpush1.bf16.msra.mxu0 %v2642
        %2719 = vmatprep.subr.bf16.mxu0 %v2645
        %2720 = vmatpush1.bf16.msra.mxu0 %v2644
        %2721 = vmatprep.subr.bf16.mxu0 %v2647
        %2722 = vmatpush1.bf16.msra.mxu0 %v2646
        %2723 = vmatprep.subr.bf16.mxu0 %v2649
        %2724 = vmatpush1.bf16.msra.mxu0 %v2648
        %2725 = vmatprep.subr.bf16.mxu0 %v2651
        %2726 = vmatpush1.bf16.msra.mxu0 %v2650
        %2727 = vmatprep.subr.bf16.mxu0 %v2653
        %2728 = vmatpush1.bf16.msra.mxu0 %v2652
        %2729 = vmatprep.mubr.bf16.mxu0 %v2168
        %2730 = vmatmul.mubr.bf16.gmra.mrb[0].mxu0 %v2167
        %v2731 = vpop.f32.mrb[0].mxu0
        %v2732 = vadd.f32 %v2508, %v2731
        %v2733 = vpop.f32.mrb[0].mxu0
        %v2734 = vadd.f32 %v2510, %v2733
        %v2735 = vpop.f32.mrb[0].mxu0
        %v2736 = vpop.f32.mrb[0].mxu0
        %2737 = vdwg.mxu0
        %2738 = vmatprep.subr.bf16.mxu0 %v2655
        %2739 = vmatpush1.bf16.msra.mxu0 %v2654
        %2740 = vmatprep.subr.bf16.mxu0 %v2657
        %2741 = vmatpush1.bf16.msra.mxu0 %v2656
        %2742 = vmatprep.subr.bf16.mxu0 0
        %2743 = vmatpush1.bf16.msra.mxu0 0
        %2744 = vmatprep.subr.bf16.mxu0 0
        %2745 = vmatpush1.bf16.msra.mxu0 0
        %2746 = vmatprep.subr.bf16.mxu0 0
        %2747 = vmatpush1.bf16.msra.mxu0 0
        %2748 = vmatprep.subr.bf16.mxu0 0
        %2749 = vmatpush1.bf16.msra.mxu0 0
        %2750 = vmatprep.subr.bf16.mxu0 0
        %2751 = vmatpush1.bf16.msra.mxu0 0
        %2752 = vmatprep.subr.bf16.mxu0 0
        %2753 = vmatpush1.bf16.msra.mxu0 0
        %2754 = vmatprep.subr.bf16.mxu0 0
        %2755 = vmatpush1.bf16.msra.mxu0 0
        %2756 = vmatprep.subr.bf16.mxu0 0
        %2757 = vmatpush1.bf16.msra.mxu0 0
        %2758 = vmatprep.subr.bf16.mxu0 0
        %2759 = vmatpush1.bf16.msra.mxu0 0
        %2760 = vmatprep.subr.bf16.mxu0 0
        %2761 = vmatpush1.bf16.msra.mxu0 0
        %2762 = vmatprep.subr.bf16.mxu0 0
        %2763 = vmatpush1.bf16.msra.mxu0 0
        %2764 = vmatprep.subr.bf16.mxu0 0
        %2765 = vmatpush1.bf16.msra.mxu0 0
        %2766 = vmatprep.subr.bf16.mxu0 0
        %2767 = vmatpush1.bf16.msra.mxu0 0
        %2768 = vmatprep.subr.bf16.mxu0 0
        %2769 = vmatpush1.bf16.msra.mxu0 0
        %2770 = vmatprep.mubr.bf16.mxu0 0
        %2771 = vmatmul.mubr.bf16.gmra.mrb[0].mxu0 %v2695
        %v2772 = vpop.f32.mrb[0].mxu0
        %v2773 = vadd.f32 %v2732, %v2772
        %v2774 = vpop.f32.mrb[0].mxu0
        %v2775 = vadd.f32 %v2734, %v2774
        %v2776 = vpop.f32.mrb[0].mxu0
        %v2777 = vpop.f32.mrb[0].mxu0
        %2778 = vdwg.mxu0
        %s2779 = scalar_lea.vmem [#allocation9], 576
        %v2780 = vld [vmem:[%s2779] sm:$0xff]
        %v2781 = vld [vmem:[%s2779 + $0x8] sm:$0xff]
        %v2782 = vld [vmem:[%s2779 + $0x10] sm:$0xff]
        %v2783 = vld [vmem:[%s2779 + $0x18] sm:$0xff]
        %v2784 = vld [vmem:[%s2779 + $0x20] sm:$0xff]
        %v2785 = vld [vmem:[%s2779 + $0x28] sm:$0xff]
        %v2786 = vld [vmem:[%s2779 + $0x30] sm:$0xff]
        %v2787 = vld [vmem:[%s2779 + $0x38] sm:$0xff]
        %v2788 = vld [vmem:[%s2779 + $0x40] sm:$0xff]
        %v2789 = vld [vmem:[%s2779 + $0x48] sm:$0xff]
        %v2790 = vld [vmem:[%s2779 + $0x50] sm:$0xff]
        %v2791 = vld [vmem:[%s2779 + $0x58] sm:$0xff]
        %v2792 = vld [vmem:[%s2779 + $0x60] sm:$0xff]
        %v2793 = vld [vmem:[%s2779 + $0x68] sm:$0xff]
        %v2794 = vld [vmem:[%s2779 + $0x70] sm:$0xff]
        %v2795 = vld [vmem:[%s2779 + $0x78] sm:$0xff]
        %v2796 = vld [vmem:[%s2779 + $0x80] sm:$0xff]
        %v2797 = vld [vmem:[%s2779 + $0x88] sm:$0xff]
        %v2798 = vld [vmem:[%s2779 + $0x90] sm:$0xff]
        %v2799 = vld [vmem:[%s2779 + $0x98] sm:$0xff]
        %v2800 = vld [vmem:[%s2779 + $0xa0] sm:$0xff]
        %v2801 = vld [vmem:[%s2779 + $0xa8] sm:$0xff]
        %v2802 = vld [vmem:[%s2779 + $0xb0] sm:$0xff]
        %v2803 = vld [vmem:[%s2779 + $0xb8] sm:$0xff]
        %v2804 = vld [vmem:[%s2779 + $0xc0] sm:$0xff]
        %v2805 = vld [vmem:[%s2779 + $0xc8] sm:$0xff]
        %v2806 = vld [vmem:[%s2779 + $0xd0] sm:$0xff]
        %v2807 = vld [vmem:[%s2779 + $0xd8] sm:$0xff]
        %v2808 = vld [vmem:[%s2779 + $0xe0] sm:$0xff]
        %v2809 = vld [vmem:[%s2779 + $0xe8] sm:$0xff]
        %v2810 = vld [vmem:[%s2779 + $0xf0] sm:$0xff]
        %v2811 = vld [vmem:[%s2779 + $0xf8] sm:$0xff]
        %v2812 = vld [vmem:[%s2779 + $0x100] sm:$0xff]
        %v2813 = vld [vmem:[%s2779 + $0x108] sm:$0xff]
        %v2814 = vld [vmem:[%s2779 + $0x110] sm:$0xff]
        %v2815 = vld [vmem:[%s2779 + $0x118] sm:$0xff]
        %v2817 = vshrl.u32 %v2173, 16
        %v2819 = vshll.u32 %v2173, 16
        %v2821 = vrot.slane %v2819, 1
        %v2822 = vor.u32 %v2817, %v2821
        %v2824 = vshrl.u32 %v2174, 16
        %v2826 = vshll.u32 %v2174, 16
        %v2828 = vrot.slane %v2826, 1
        %v2829 = vor.u32 %v2824, %v2828
        %v2831 = vshrl.u32 %v2175, 16
        %v2833 = vshll.u32 %v2175, 16
        %v2835 = vrot.slane %v2833, 1
        %v2836 = vor.u32 %v2831, %v2835
        %v2875 = vunpack.c.l.b16 %v2780
        %v2876 = vunpack.c.h.b16 %v2780
        %v2877 = vunpack.c.l.b16 %v2781
        %v2878 = vunpack.c.h.b16 %v2781
        %v2879 = vunpack.c.l.b16 %v2782
        %v2880 = vunpack.c.h.b16 %v2782
        %v2881 = vunpack.c.l.b16 %v2783
        %v2882 = vunpack.c.h.b16 %v2783
        %v2883 = vunpack.c.l.b16 %v2784
        %v2884 = vunpack.c.h.b16 %v2784
        %v2885 = vunpack.c.l.b16 %v2785
        %v2886 = vunpack.c.h.b16 %v2785
        %v2887 = vunpack.c.l.b16 %v2786
        %v2888 = vunpack.c.h.b16 %v2786
        %v2889 = vunpack.c.l.b16 %v2787
        %v2890 = vunpack.c.h.b16 %v2787
        %v2891 = vunpack.c.l.b16 %v2788
        %v2892 = vunpack.c.h.b16 %v2788
        %v2893 = vunpack.c.l.b16 %v2789
        %v2894 = vunpack.c.h.b16 %v2789
        %v2895 = vunpack.c.l.b16 %v2790
        %v2896 = vunpack.c.h.b16 %v2790
        %v2897 = vunpack.c.l.b16 %v2791
        %v2898 = vunpack.c.h.b16 %v2791
        %v2899 = vunpack.c.l.b16 %v2792
        %v2900 = vunpack.c.h.b16 %v2792
        %v2901 = vunpack.c.l.b16 %v2793
        %v2902 = vunpack.c.h.b16 %v2793
        %v2903 = vunpack.c.l.b16 %v2794
        %v2904 = vunpack.c.h.b16 %v2794
        %v2905 = vunpack.c.l.b16 %v2795
        %v2906 = vunpack.c.h.b16 %v2795
        %v2907 = vunpack.c.l.b16 %v2796
        %v2908 = vunpack.c.h.b16 %v2796
        %v2909 = vunpack.c.l.b16 %v2797
        %v2910 = vunpack.c.h.b16 %v2797
        %v2911 = vunpack.c.l.b16 %v2798
        %v2912 = vunpack.c.h.b16 %v2798
        %v2913 = vunpack.c.l.b16 %v2799
        %v2914 = vunpack.c.h.b16 %v2799
        %v2915 = vunpack.c.l.b16 %v2800
        %v2916 = vunpack.c.h.b16 %v2800
        %v2917 = vunpack.c.l.b16 %v2801
        %v2918 = vunpack.c.h.b16 %v2801
        %v2919 = vunpack.c.l.b16 %v2802
        %v2920 = vunpack.c.h.b16 %v2802
        %v2921 = vunpack.c.l.b16 %v2803
        %v2922 = vunpack.c.h.b16 %v2803
        %v2923 = vunpack.c.l.b16 %v2804
        %v2924 = vunpack.c.h.b16 %v2804
        %v2925 = vunpack.c.l.b16 %v2805
        %v2926 = vunpack.c.h.b16 %v2805
        %v2927 = vunpack.c.l.b16 %v2806
        %v2928 = vunpack.c.h.b16 %v2806
        %v2929 = vunpack.c.l.b16 %v2807
        %v2930 = vunpack.c.h.b16 %v2807
        %v2931 = vunpack.c.l.b16 %v2808
        %v2932 = vunpack.c.h.b16 %v2808
        %v2933 = vunpack.c.l.b16 %v2809
        %v2934 = vunpack.c.h.b16 %v2809
        %v2935 = vunpack.c.l.b16 %v2810
        %v2936 = vunpack.c.h.b16 %v2810
        %v2937 = vunpack.c.l.b16 %v2811
        %v2938 = vunpack.c.h.b16 %v2811
        %v2939 = vunpack.c.l.b16 %v2812
        %v2940 = vunpack.c.h.b16 %v2812
        %v2941 = vunpack.c.l.b16 %v2813
        %v2942 = vunpack.c.h.b16 %v2813
        %v2943 = vunpack.c.l.b16 %v2814
        %v2944 = vunpack.c.h.b16 %v2814
        %v2945 = vunpack.c.l.b16 %v2815
        %v2946 = vunpack.c.h.b16 %v2815
        %v2947 = vpack.c.b16 %v2877, %v2875
        %v2948 = vpack.c.b16 %v2878, %v2876
        %v2949 = vpack.c.b16 %v2881, %v2879
        %v2950 = vpack.c.b16 %v2882, %v2880
        %v2951 = vpack.c.b16 %v2885, %v2883
        %v2952 = vpack.c.b16 %v2886, %v2884
        %v2953 = vpack.c.b16 %v2889, %v2887
        %v2954 = vpack.c.b16 %v2890, %v2888
        %v2955 = vpack.c.b16 %v2893, %v2891
        %v2956 = vpack.c.b16 %v2894, %v2892
        %v2957 = vpack.c.b16 %v2897, %v2895
        %v2958 = vpack.c.b16 %v2898, %v2896
        %v2959 = vpack.c.b16 %v2901, %v2899
        %v2960 = vpack.c.b16 %v2902, %v2900
        %v2961 = vpack.c.b16 %v2905, %v2903
        %v2962 = vpack.c.b16 %v2906, %v2904
        %v2963 = vpack.c.b16 %v2909, %v2907
        %v2964 = vpack.c.b16 %v2910, %v2908
        %v2965 = vpack.c.b16 %v2913, %v2911
        %v2966 = vpack.c.b16 %v2914, %v2912
        %v2967 = vpack.c.b16 %v2917, %v2915
        %v2968 = vpack.c.b16 %v2918, %v2916
        %v2969 = vpack.c.b16 %v2921, %v2919
        %v2970 = vpack.c.b16 %v2922, %v2920
        %v2971 = vpack.c.b16 %v2925, %v2923
        %v2972 = vpack.c.b16 %v2926, %v2924
        %v2973 = vpack.c.b16 %v2929, %v2927
        %v2974 = vpack.c.b16 %v2930, %v2928
        %v2975 = vpack.c.b16 %v2933, %v2931
        %v2976 = vpack.c.b16 %v2934, %v2932
        %v2977 = vpack.c.b16 %v2937, %v2935
        %v2978 = vpack.c.b16 %v2938, %v2936
        %v2979 = vpack.c.b16 %v2941, %v2939
        %v2980 = vpack.c.b16 %v2942, %v2940
        %v2981 = vpack.c.b16 %v2945, %v2943
        %v2982 = vpack.c.b16 %v2946, %v2944
        %v3020 = vsel %vm351, %v2836, 0
        %3022 = vmatprep.subr.bf16.mxu0 %v2948
        %3023 = vmatpush1.bf16.msra.mxu0 %v2947
        %3024 = vmatprep.subr.bf16.mxu0 %v2950
        %3025 = vmatpush1.bf16.msra.mxu0 %v2949
        %3026 = vmatprep.subr.bf16.mxu0 %v2952
        %3027 = vmatpush1.bf16.msra.mxu0 %v2951
        %3028 = vmatprep.subr.bf16.mxu0 %v2954
        %3029 = vmatpush1.bf16.msra.mxu0 %v2953
        %3030 = vmatprep.subr.bf16.mxu0 %v2956
        %3031 = vmatpush1.bf16.msra.mxu0 %v2955
        %3032 = vmatprep.subr.bf16.mxu0 %v2958
        %3033 = vmatpush1.bf16.msra.mxu0 %v2957
        %3034 = vmatprep.subr.bf16.mxu0 %v2960
        %3035 = vmatpush1.bf16.msra.mxu0 %v2959
        %3036 = vmatprep.subr.bf16.mxu0 %v2962
        %3037 = vmatpush1.bf16.msra.mxu0 %v2961
        %3038 = vmatprep.subr.bf16.mxu0 %v2964
        %3039 = vmatpush1.bf16.msra.mxu0 %v2963
        %3040 = vmatprep.subr.bf16.mxu0 %v2966
        %3041 = vmatpush1.bf16.msra.mxu0 %v2965
        %3042 = vmatprep.subr.bf16.mxu0 %v2968
        %3043 = vmatpush1.bf16.msra.mxu0 %v2967
        %3044 = vmatprep.subr.bf16.mxu0 %v2970
        %3045 = vmatpush1.bf16.msra.mxu0 %v2969
        %3046 = vmatprep.subr.bf16.mxu0 %v2972
        %3047 = vmatpush1.bf16.msra.mxu0 %v2971
        %3048 = vmatprep.subr.bf16.mxu0 %v2974
        %3049 = vmatpush1.bf16.msra.mxu0 %v2973
        %3050 = vmatprep.subr.bf16.mxu0 %v2976
        %3051 = vmatpush1.bf16.msra.mxu0 %v2975
        %3052 = vmatprep.subr.bf16.mxu0 %v2978
        %3053 = vmatpush1.bf16.msra.mxu0 %v2977
        %3054 = vmatprep.mubr.bf16.mxu0 %v2829
        %3055 = vmatmul.mubr.bf16.gmra.mrb[0].mxu0 %v2822
        %v3056 = vpop.f32.mrb[0].mxu0
        %v3057 = vadd.f32 0.0, %v3056
        %v3058 = vpop.f32.mrb[0].mxu0
        %v3059 = vadd.f32 0.0, %v3058
        %v3060 = vpop.f32.mrb[0].mxu0
        %v3061 = vpop.f32.mrb[0].mxu0
        %3062 = vdwg.mxu0
        %3063 = vmatprep.subr.bf16.mxu0 %v2980
        %3064 = vmatpush1.bf16.msra.mxu0 %v2979
        %3065 = vmatprep.subr.bf16.mxu0 %v2982
        %3066 = vmatpush1.bf16.msra.mxu0 %v2981
        %3067 = vmatprep.subr.bf16.mxu0 0
        %3068 = vmatpush1.bf16.msra.mxu0 0
        %3069 = vmatprep.subr.bf16.mxu0 0
        %3070 = vmatpush1.bf16.msra.mxu0 0
        %3071 = vmatprep.subr.bf16.mxu0 0
        %3072 = vmatpush1.bf16.msra.mxu0 0
        %3073 = vmatprep.subr.bf16.mxu0 0
        %3074 = vmatpush1.bf16.msra.mxu0 0
        %3075 = vmatprep.subr.bf16.mxu0 0
        %3076 = vmatpush1.bf16.msra.mxu0 0
        %3077 = vmatprep.subr.bf16.mxu0 0
        %3078 = vmatpush1.bf16.msra.mxu0 0
        %3079 = vmatprep.subr.bf16.mxu0 0
        %3080 = vmatpush1.bf16.msra.mxu0 0
        %3081 = vmatprep.subr.bf16.mxu0 0
        %3082 = vmatpush1.bf16.msra.mxu0 0
        %3083 = vmatprep.subr.bf16.mxu0 0
        %3084 = vmatpush1.bf16.msra.mxu0 0
        %3085 = vmatprep.subr.bf16.mxu0 0
        %3086 = vmatpush1.bf16.msra.mxu0 0
        %3087 = vmatprep.subr.bf16.mxu0 0
        %3088 = vmatpush1.bf16.msra.mxu0 0
        %3089 = vmatprep.subr.bf16.mxu0 0
        %3090 = vmatpush1.bf16.msra.mxu0 0
        %3091 = vmatprep.subr.bf16.mxu0 0
        %3092 = vmatpush1.bf16.msra.mxu0 0
        %3093 = vmatprep.subr.bf16.mxu0 0
        %3094 = vmatpush1.bf16.msra.mxu0 0
        %3095 = vmatprep.mubr.bf16.mxu0 0
        %3096 = vmatmul.mubr.bf16.gmra.mrb[0].mxu0 %v3020
        %v3097 = vpop.f32.mrb[0].mxu0
        %v3098 = vadd.f32 %v3057, %v3097
        %v3099 = vpop.f32.mrb[0].mxu0
        %v3100 = vadd.f32 %v3059, %v3099
        %v3101 = vpop.f32.mrb[0].mxu0
        %v3102 = vpop.f32.mrb[0].mxu0
        %3103 = vdwg.mxu0
        %v3104 = vadd.f32 %v2773, %v3098
        %v3105 = vadd.f32 %v2775, %v3100
        %v3106 = vld [vmem:[%s6] sm:$0x3]
        %v3108 = vlaneseq
        %v3109 = vshrl.u32 %v3108, 7
        %v3110 = vsub.s32 0, %v3109
        %v3111 = vrot.slane %v3106, %v3110
        %v3112 = vlaneseq
        %v3113 = vshrl.u32 %v3112, 7
        %v3114 = vsub.s32 1, %v3113
        %v3115 = vrot.slane %v3106, %v3114
        %v3118 = vadd.f32 %v3104, %v3111
        %v3119 = vadd.f32 %v3105, %v3115
        %v3120 = vmax.f32 %v3118, 0.0
        %v3121 = vmax.f32 %v3119, 0.0
        %3122 = vst [vmem:[%s342] sm:$0xff] %v3120
        %3123 = vst [vmem:[%s342 + $0x8] sm:$0xff] %v3121
        %p3124 = scmp.lt.s32.totalorder %s23, 1
        %s3125 = scalar_select %p3124, %s23, 1
        %s3126 = smul.addr %s3125, 2
        %s3127 = smul.addr %s3126, 8
        %s3128 = scalar_lea.vmem %s7, %s3127
        // Predicated region
        $region65: #{backbone_forward.1} parent=47 // pred_check
          %p3129 = pneg %p193
        $region66: #{backbone_forward.1} parent=47 // pred_check_branch
          %3131 = sbr.rel (%p3129) target = $region68
        $region67: #{backbone_forward.1} parent=47 // pred_region
          _
        $region68: #{backbone_forward.1} parent=47 // pred_fallthru
          _
      $region48: #{backbone_forward.1} parent=5 // pred_fallthru
        _
      %p3132 = scmp.le.s32.totalorder 2, %s18
      // Predicated region
      $region69: #{backbone_forward.1} parent=5 // pred_check
        %p3133 = pneg %p3132
      $region70: #{backbone_forward.1} parent=5 // pred_check_branch
        %3135 = sbr.rel (%p3133) target = $region72
      $region71: #{backbone_forward.1} parent=5 // pred_region
        %s3136 = ssub.s32 %s18, 2
        // Predicated region
        $region73: #{backbone_forward.1} parent=71 // pred_check
          %p3137 = pneg %p199
        $region74: #{backbone_forward.1} parent=71 // pred_check_branch
          %3139 = sbr.rel (%p3137) target = $region76
        $region75: #{backbone_forward.1} parent=71 // pred_region
          %p3140 = scmp.lt.s32.totalorder %s24, 1
          %s3141 = scalar_select %p3140, %s24, 1
          %s3142 = smul.addr %s3141, 2
          %s3143 = smul.addr %s3142, 8
          %s3144 = scalar_lea.vmem %s7, %s3143
        $region76: #{backbone_forward.1} parent=71 // pred_fallthru
          _
      $region72: #{backbone_forward.1} parent=5 // pred_fallthru
        _
    $region6: #{backbone_forward.1} parent=1 // loop_footer
      %s22 = sadd.s32 1, %s18
    $region7: #{backbone_forward.1} parent=1 // loop_footer_branch
      %17 = sbr.rel target = $region3
    $region8: #{backbone_forward.1} parent=1 // loop_exit
      _
    %3145 = vsyncpa [#allocation5], 1
    %s3146 = scalar_lea.sflag [#allocation5], 1
    %3147 = vsyncpa %s3146, 1
    %3148 = vsyncpa [#allocation7], 1
    %3149 = vsyncpa [#allocation10], 1

</llo_original>
